<compile_context>
chip_gen: v7x
topology: tpu7x:2x2x1
jax: 0.10.0
libtpu: 0.0.40
codegen_flags: <defaults>
</compile_context>

<pallas_src>
import math

import numpy as np
import jax
import jax.numpy as jnp
from jax.experimental import pallas as pl
from jax.experimental.pallas import tpu as pltpu


def _softplus(x):
    # numerically stable softplus, matches F.softplus semantics
    return jnp.maximum(x, 0.0) + jnp.log1p(jnp.exp(-jnp.abs(x)))


def _make_kernel(num_layers):
    """Kernel body: whole (padded) ensemble in one step via block-diag matmuls."""

    def kernel(*refs):
        idx = 0
        x_ref = refs[idx]; idx += 1
        w_refs, b_refs = [], []
        for _ in range(num_layers):
            w_refs.append(refs[idx]); b_refs.append(refs[idx + 1]); idx += 2
        wh_ref = refs[idx]; idx += 1      # (E_pad*hid, E_pad*HEAD_W) block-diag head
        bh_ref = refs[idx]; idx += 1      # (1, E_pad*HEAD_W)
        min_ref = refs[idx]; idx += 1     # (1, E_pad*HEAD_W)
        max_ref = refs[idx]; idx += 1     # (1, E_pad*HEAD_W)
        msk_ref = refs[idx]; idx += 1     # (1, E_pad*HEAD_W) 1.0 on logvar columns
        out_ref = refs[idx]               # (batch, E_pad*HEAD_W)

        h = x_ref[...]                                     # (batch, in_dim)
        for l in range(num_layers):
            h = jnp.dot(h, w_refs[l][...],
                        preferred_element_type=jnp.float32) + b_refs[l][...]
            h = h * jax.nn.sigmoid(h)                      # swish (dropout pre-folded)

        # fused head: per member [mean | logvar | reward | zero-pad], lane-dense
        out = jnp.dot(h, wh_ref[...],
                      preferred_element_type=jnp.float32) + bh_ref[...]

        # soft_clamp only the logvar columns (selected by precomputed 0/1 mask)
        max_lv = max_ref[...]
        min_lv = min_ref[...]
        lv_mask = msk_ref[...]
        clamped = max_lv - _softplus(max_lv - out)
        clamped = min_lv + _softplus(clamped - min_lv)
        out_ref[...] = lv_mask * clamped + (1.0 - lv_mask) * out
        # reward_final_activation == 'none' -> identity
        # TODO(synk): 'sigmoid'/'relu' reward_final_activation variants not wired in.

    return kernel


def _block_diag(W):
    """(E, di, do) -> block-diagonal (E*di, E*do); block (e,e) = W[e]."""
    E, di, do = W.shape
    eye = jnp.eye(E, dtype=W.dtype)
    return jnp.einsum('eij,ef->eifj', W, eye).reshape(E * di, E * do)


def _concat_bias(b, E_pad):
    """(E_pad, 1, do) -> (1, E_pad*do)."""
    return jnp.transpose(b, (1, 0, 2)).reshape(1, -1)


def _forward_impl(x, backbone_params, masks, W_ns, b_ns, W_r, b_r,
                  min_logvar, max_logvar):
    """x: (batch, obs+act); backbone_params: list of (W=(E,di,do), b=(E,1,do));
    masks: list of (do,) 0/1 dropout masks (train=True semantics)."""
    x = jnp.asarray(x, jnp.float32)
    batch, in_dim = x.shape
    E, hid, two_obs = W_ns.shape
    obs_dim = two_obs // 2
    num_layers = len(backbone_params)
    layer_dims = [int(W.shape[2]) for W, _ in backbone_params]

    # ---- fold dropout masks into the following layer's weights (exact for 0/1) ----
    Ws = [W for W, _ in backbone_params]
    bs = [b for _, b in backbone_params]
    Ws = [Ws[0]] + [Ws[l] * masks[l - 1][None, :, None] for l in range(1, num_layers)]

    # ---- fuse reward head into next-state head, fold last mask, pad to 128 lanes ----
    W_head = jnp.concatenate([W_ns, W_r], axis=-1) * masks[-1][None, :, None]
    b_head = jnp.concatenate([b_ns, b_r], axis=-1)
    head_w_real = 2 * obs_dim + 1
    HEAD_W = 128 * pl.cdiv(head_w_real, 128)
    pad_w = HEAD_W - head_w_real
    W_head = jnp.pad(W_head, ((0, 0), (0, 0), (0, pad_w)))
    b_head = jnp.pad(b_head, ((0, 0), (0, 0), (0, pad_w)))

    # ---- pad the ensemble so packed hidden widths are lane(128)-aligned when cheap ----
    g = int(np.gcd.reduce([128] + layer_dims))
    align = 128 // g
    E_pad = align * pl.cdiv(E, align) if align <= 8 else E
    pad_e = E_pad - E

    def pad_ens(a):
        return jnp.pad(a, ((0, pad_e),) + ((0, 0),) * (a.ndim - 1))

    Ws = [pad_ens(W) for W in Ws]
    bs = [pad_ens(b) for b in bs]
    W_head = pad_ens(W_head)            # (E_pad, hid, HEAD_W)
    b_head = pad_ens(b_head)            # (E_pad, 1, HEAD_W)

    # ---- pack members into one lane-dense matmul per layer ----
    # layer 0: shared input -> concatenate along N
    W0_c = jnp.transpose(Ws[0], (1, 0, 2)).reshape(in_dim, E_pad * layer_dims[0])
    packed_Ws = [W0_c] + [_block_diag(Ws[l]) for l in range(1, num_layers)]
    packed_bs = [_concat_bias(b, E_pad) for b in bs]
    Wh_bd = _block_diag(W_head)                     # (E_pad*hid, E_pad*HEAD_W)
    bh_c = _concat_bias(b_head, E_pad)              # (1, E_pad*HEAD_W)

    # ---- soft-clamp column metadata, tiled across members ----
    min_lv = jnp.asarray(min_logvar, jnp.float32).reshape(-1)
    max_lv = jnp.asarray(max_logvar, jnp.float32).reshape(-1)
    zeros_obs = jnp.zeros((obs_dim,), jnp.float32)
    tail = jnp.zeros((HEAD_W - 2 * obs_dim,), jnp.float32)   # reward col + pad
    min_one = jnp.concatenate([zeros_obs, min_lv, tail])
    max_one = jnp.concatenate([zeros_obs, max_lv, tail])
    msk_one = jnp.concatenate([zeros_obs, jnp.ones((obs_dim,), jnp.float32), tail])
    min_full = jnp.tile(min_one, (E_pad,))[None, :]          # (1, E_pad*HEAD_W)
    max_full = jnp.tile(max_one, (E_pad,))[None, :]
    msk_full = jnp.tile(msk_one, (E_pad,))[None, :]

    # ---- specs / operands (grid=(1,): single step, single writeback DMA) ----
    def full_spec(a):
        return pl.BlockSpec(a.shape, lambda i: (0,) * a.ndim)

    operands = [x]
    in_specs = [full_spec(x)]
    for W, b in zip(packed_Ws, packed_bs):
        operands += [W, b]
        in_specs += [full_spec(W), full_spec(b)]
    operands += [Wh_bd, bh_c, min_full, max_full, msk_full]
    in_specs += [full_spec(Wh_bd), full_spec(bh_c),
                 full_spec(min_full), full_spec(max_full), full_spec(msk_full)]

    out_width = E_pad * HEAD_W
    out_specs = pl.BlockSpec((batch, out_width), lambda i: (0, 0))
    out_shape = jax.ShapeDtypeStruct((batch, out_width), jnp.float32)

    out = pl.pallas_call(
        _make_kernel(num_layers),
        out_shape=out_shape,
        grid_spec=pltpu.PrefetchScalarGridSpec(
            num_scalar_prefetch=0,
            grid=(1,),
            in_specs=in_specs,
            out_specs=out_specs,
        ),
        compiler_params=pltpu.CompilerParams(
            dimension_semantics=("arbitrary",)),
    )(*operands)

    # ---- wrapper-side split (free layout plumbing, fused under jit) ----
    out = out.reshape(batch, E_pad, HEAD_W)
    out = jnp.transpose(out, (1, 0, 2))[:E, :, :head_w_real]
    sp_mean = out[..., :obs_dim]
    sp_logvar = out[..., obs_dim:2 * obs_dim]
    reward = out[..., 2 * obs_dim:2 * obs_dim + 1]
    return sp_mean, sp_logvar, reward


# jit the whole wrapper: weight packing, the pallas kernel, and the output split
# compile into one fused program instead of many per-call XLA ops.
ensemble_dynamics_forward = jax.jit(_forward_impl)


def reference_forward(x, backbone_params, masks, W_ns, b_ns, W_r, b_r,
                      min_logvar, max_logvar):
    """Pure-JAX reference reproducing the PyTorch forward (train=True)."""
    obs_dim = W_ns.shape[2] // 2
    W0, b0 = backbone_params[0]
    h = jnp.einsum('ij,ejk->eik', x, W0) + b0
    h = h * jax.nn.sigmoid(h)
    h = h * masks[0][None, None, :]
    for (W, b), m in zip(backbone_params[1:], masks[1:]):
        h = jnp.einsum('eij,ejk->eik', h, W) + b
        h = h * jax.nn.sigmoid(h)
        h = h * m[None, None, :]
    out_ns = jnp.einsum('eij,ejk->eik', h, W_ns) + b_ns
    mean, logvar = out_ns[..., :obs_dim], out_ns[..., obs_dim:]
    logvar = max_logvar - jax.nn.softplus(max_logvar - logvar)
    logvar = min_logvar + jax.nn.softplus(logvar - min_logvar)
    reward = jnp.einsum('eij,ejk->eik', h, W_r) + b_r
    return mean, logvar, reward


if __name__ == "__main__":
    # small shapes consistent with the module
    obs_dim, action_dim = 11, 3
    hidden_dims = [32, 32]
    num_ensemble = 7
    batch = 16
    in_dim = obs_dim + action_dim

    key = jax.random.PRNGKey(0)
    keys = jax.random.split(key, 16)

    # deterministic synthetic parameters (trunc-normal-ish scale: 1/(2*sqrt(in)))
    dims = [in_dim] + hidden_dims
    backbone_params = []
    ki = 0
    for di, do in zip(dims[:-1], dims[1:]):
        W = (jax.random.normal(keys[ki], (num_ensemble, di, do), jnp.float32)
             / (2.0 * np.sqrt(di)))
        b = jnp.zeros((num_ensemble, 1, do), jnp.float32)
        backbone_params.append((W, b))
        ki += 1

    hid = dims[-1]
    W_ns = (jax.random.normal(keys[ki], (num_ensemble, hid, 2 * obs_dim),
                              jnp.float32) / (2.0 * np.sqrt(hid))); ki += 1
    b_ns = jnp.zeros((num_ensemble, 1, 2 * obs_dim), jnp.float32)
    W_r = (jax.random.normal(keys[ki], (num_ensemble, hid, 1), jnp.float32)
           / (2.0 * np.sqrt(hid))); ki += 1
    b_r = jnp.zeros((num_ensemble, 1, 1), jnp.float32)

    max_logvar = jnp.full((obs_dim,), 0.5, jnp.float32)
    min_logvar = jnp.full((obs_dim,), -10.0, jnp.float32)

    # deterministic 0/1 dropout masks (train=True path), keep prob ~0.8
    masks = []
    for do in hidden_dims:
        m = (jax.random.uniform(keys[ki], (do,)) > 0.2).astype(jnp.float32)
        masks.append(m)
        ki += 1

    x = jax.random.normal(keys[ki], (batch, in_dim), jnp.float32)

    sp_mean, sp_logvar, reward = ensemble_dynamics_forward(
        x, backbone_params, masks, W_ns, b_ns, W_r, b_r, min_logvar, max_logvar)
    jax.block_until_ready((sp_mean, sp_logvar, reward))

    ref_mean, ref_logvar, ref_reward = reference_forward(
        x, backbone_params, masks, W_ns, b_ns, W_r, b_r, min_logvar, max_logvar)

    assert sp_mean.shape == (num_ensemble, batch, obs_dim)
    assert sp_logvar.shape == (num_ensemble, batch, obs_dim)
    assert reward.shape == (num_ensemble, batch, 1)
    np.testing.assert_allclose(np.asarray(sp_mean), np.asarray(ref_mean),
                               rtol=1e-5, atol=1e-5)
    np.testing.assert_allclose(np.asarray(sp_logvar), np.asarray(ref_logvar),
                               rtol=1e-5, atol=1e-5)
    np.testing.assert_allclose(np.asarray(reward), np.asarray(ref_reward),
                               rtol=1e-5, atol=1e-5)

    print("KERNEL_OK")
</pallas_src>

<mosaic_0001>
module attributes {stable_mosaic.version = 11 : i64} {
  func.func @kernel(%arg0: i32, %arg1: memref<16x14xf32, #tpu.memory_space<vmem>>, %arg2: memref<14x256xf32, #tpu.memory_space<vmem>>, %arg3: memref<1x256xf32, #tpu.memory_space<vmem>>, %arg4: memref<256x256xf32, #tpu.memory_space<vmem>>, %arg5: memref<1x256xf32, #tpu.memory_space<vmem>>, %arg6: memref<256x1024xf32, #tpu.memory_space<vmem>>, %arg7: memref<1x1024xf32, #tpu.memory_space<vmem>>, %arg8: memref<1x1024xf32, #tpu.memory_space<vmem>>, %arg9: memref<1x1024xf32, #tpu.memory_space<vmem>>, %arg10: memref<1x1024xf32, #tpu.memory_space<vmem>>, %arg11: memref<16x1024xf32, #tpu.memory_space<vmem>>) attributes {dimension_semantics = [#tpu.dimension_semantics<arbitrary>], iteration_bounds = array<i64: 1>, scalar_prefetch = 0 : i64, scratch_operands = 0 : i64, tpu.core_type = #tpu.core_type<tc>, window_params = [{pipeline_mode = #tpu.pipeline_mode<synchronous>, transform_indices = @transform_0, window_bounds = array<i64: 16, 14>}, {pipeline_mode = #tpu.pipeline_mode<synchronous>, transform_indices = @transform_1, window_bounds = array<i64: 14, 256>}, {pipeline_mode = #tpu.pipeline_mode<synchronous>, transform_indices = @transform_2, window_bounds = array<i64: 1, 256>}, {pipeline_mode = #tpu.pipeline_mode<synchronous>, transform_indices = @transform_3, window_bounds = array<i64: 256, 256>}, {pipeline_mode = #tpu.pipeline_mode<synchronous>, transform_indices = @transform_4, window_bounds = array<i64: 1, 256>}, {pipeline_mode = #tpu.pipeline_mode<synchronous>, transform_indices = @transform_5, window_bounds = array<i64: 256, 1024>}, {pipeline_mode = #tpu.pipeline_mode<synchronous>, transform_indices = @transform_6, window_bounds = array<i64: 1, 1024>}, {pipeline_mode = #tpu.pipeline_mode<synchronous>, transform_indices = @transform_7, window_bounds = array<i64: 1, 1024>}, {pipeline_mode = #tpu.pipeline_mode<synchronous>, transform_indices = @transform_8, window_bounds = array<i64: 1, 1024>}, {pipeline_mode = #tpu.pipeline_mode<synchronous>, transform_indices = @transform_9, window_bounds = array<i64: 1, 1024>}, {pipeline_mode = #tpu.pipeline_mode<synchronous>, transform_indices = @transform_10, window_bounds = array<i64: 16, 1024>}]} {
    %c0 = arith.constant 0 : index
    %c0_0 = arith.constant 0 : index
    %0 = vector.load %arg1[%c0, %c0_0] : memref<16x14xf32, #tpu.memory_space<vmem>>, vector<16x14xf32>
    %c0_1 = arith.constant 0 : index
    %c0_2 = arith.constant 0 : index
    %1 = vector.load %arg2[%c0_1, %c0_2] : memref<14x256xf32, #tpu.memory_space<vmem>>, vector<14x256xf32>
    %cst = arith.constant dense<0.000000e+00> : vector<16x256xf32>
    %2 = tpu.matmul %0, %1, %cst {dimension_numbers = #tpu.dot_dimension_numbers<[1], [0], [0], [1], [0, 0, 1, 1], [], []>} : vector<16x14xf32>, vector<14x256xf32>, vector<16x256xf32> -> vector<16x256xf32>
    %c0_3 = arith.constant 0 : index
    %c0_4 = arith.constant 0 : index
    %3 = vector.load %arg3[%c0_3, %c0_4] : memref<1x256xf32, #tpu.memory_space<vmem>>, vector<1x256xf32>
    %4 = vector.broadcast %3 : vector<1x256xf32> to vector<16x256xf32>
    %5 = arith.addf %2, %4 : vector<16x256xf32>
    %6 = arith.negf %5 : vector<16x256xf32>
    %7 = math.exp %6 : vector<16x256xf32>
    %cst_5 = arith.constant 1.000000e+00 : f32
    %8 = vector.broadcast %cst_5 : f32 to vector<16x256xf32>
    %9 = arith.addf %8, %7 : vector<16x256xf32>
    %10 = arith.divf %8, %9 : vector<16x256xf32>
    %11 = arith.mulf %5, %10 : vector<16x256xf32>
    %c0_6 = arith.constant 0 : index
    %c0_7 = arith.constant 0 : index
    %12 = vector.load %arg4[%c0_6, %c0_7] : memref<256x256xf32, #tpu.memory_space<vmem>>, vector<256x256xf32>
    %cst_8 = arith.constant dense<0.000000e+00> : vector<16x256xf32>
    %13 = tpu.matmul %11, %12, %cst_8 {dimension_numbers = #tpu.dot_dimension_numbers<[1], [0], [0], [1], [0, 0, 1, 1], [], []>} : vector<16x256xf32>, vector<256x256xf32>, vector<16x256xf32> -> vector<16x256xf32>
    %c0_9 = arith.constant 0 : index
    %c0_10 = arith.constant 0 : index
    %14 = vector.load %arg5[%c0_9, %c0_10] : memref<1x256xf32, #tpu.memory_space<vmem>>, vector<1x256xf32>
    %15 = vector.broadcast %14 : vector<1x256xf32> to vector<16x256xf32>
    %16 = arith.addf %13, %15 : vector<16x256xf32>
    %17 = arith.negf %16 : vector<16x256xf32>
    %18 = math.exp %17 : vector<16x256xf32>
    %cst_11 = arith.constant 1.000000e+00 : f32
    %19 = vector.broadcast %cst_11 : f32 to vector<16x256xf32>
    %20 = arith.addf %19, %18 : vector<16x256xf32>
    %21 = arith.divf %19, %20 : vector<16x256xf32>
    %22 = arith.mulf %16, %21 : vector<16x256xf32>
    %c0_12 = arith.constant 0 : index
    %c0_13 = arith.constant 0 : index
    %23 = vector.load %arg6[%c0_12, %c0_13] : memref<256x1024xf32, #tpu.memory_space<vmem>>, vector<256x1024xf32>
    %cst_14 = arith.constant dense<0.000000e+00> : vector<16x1024xf32>
    %24 = tpu.matmul %22, %23, %cst_14 {dimension_numbers = #tpu.dot_dimension_numbers<[1], [0], [0], [1], [0, 0, 1, 1], [], []>} : vector<16x256xf32>, vector<256x1024xf32>, vector<16x1024xf32> -> vector<16x1024xf32>
    %c0_15 = arith.constant 0 : index
    %c0_16 = arith.constant 0 : index
    %25 = vector.load %arg7[%c0_15, %c0_16] : memref<1x1024xf32, #tpu.memory_space<vmem>>, vector<1x1024xf32>
    %26 = vector.broadcast %25 : vector<1x1024xf32> to vector<16x1024xf32>
    %27 = arith.addf %24, %26 : vector<16x1024xf32>
    %c0_17 = arith.constant 0 : index
    %c0_18 = arith.constant 0 : index
    %28 = vector.load %arg9[%c0_17, %c0_18] : memref<1x1024xf32, #tpu.memory_space<vmem>>, vector<1x1024xf32>
    %c0_19 = arith.constant 0 : index
    %c0_20 = arith.constant 0 : index
    %29 = vector.load %arg8[%c0_19, %c0_20] : memref<1x1024xf32, #tpu.memory_space<vmem>>, vector<1x1024xf32>
    %c0_21 = arith.constant 0 : index
    %c0_22 = arith.constant 0 : index
    %30 = vector.load %arg10[%c0_21, %c0_22] : memref<1x1024xf32, #tpu.memory_space<vmem>>, vector<1x1024xf32>
    %31 = vector.broadcast %28 : vector<1x1024xf32> to vector<16x1024xf32>
    %32 = arith.subf %31, %27 : vector<16x1024xf32>
    %cst_23 = arith.constant 0.000000e+00 : f32
    %33 = vector.broadcast %cst_23 : f32 to vector<16x1024xf32>
    %34 = arith.maximumf %32, %33 : vector<16x1024xf32>
    %35 = math.absf %32 : vector<16x1024xf32>
    %cst_24 = arith.constant 0.000000e+00 : f32
    %36 = vector.broadcast %cst_24 : f32 to vector<16x1024xf32>
    %37 = arith.subf %36, %35 : vector<16x1024xf32>
    %38 = math.exp %37 : vector<16x1024xf32>
    %39 = math.log1p %38 : vector<16x1024xf32>
    %40 = arith.addf %34, %39 : vector<16x1024xf32>
    %41 = vector.broadcast %28 : vector<1x1024xf32> to vector<16x1024xf32>
    %42 = arith.subf %41, %40 : vector<16x1024xf32>
    %43 = vector.broadcast %29 : vector<1x1024xf32> to vector<16x1024xf32>
    %44 = arith.subf %42, %43 : vector<16x1024xf32>
    %cst_25 = arith.constant 0.000000e+00 : f32
    %45 = vector.broadcast %cst_25 : f32 to vector<16x1024xf32>
    %46 = arith.maximumf %44, %45 : vector<16x1024xf32>
    %47 = math.absf %44 : vector<16x1024xf32>
    %cst_26 = arith.constant 0.000000e+00 : f32
    %48 = vector.broadcast %cst_26 : f32 to vector<16x1024xf32>
    %49 = arith.subf %48, %47 : vector<16x1024xf32>
    %50 = math.exp %49 : vector<16x1024xf32>
    %51 = math.log1p %50 : vector<16x1024xf32>
    %52 = arith.addf %46, %51 : vector<16x1024xf32>
    %53 = vector.broadcast %29 : vector<1x1024xf32> to vector<16x1024xf32>
    %54 = arith.addf %53, %52 : vector<16x1024xf32>
    %55 = vector.broadcast %30 : vector<1x1024xf32> to vector<16x1024xf32>
    %56 = arith.mulf %55, %54 : vector<16x1024xf32>
    %cst_27 = arith.constant 1.000000e+00 : f32
    %57 = vector.broadcast %cst_27 : f32 to vector<1x1024xf32>
    %58 = arith.subf %57, %30 : vector<1x1024xf32>
    %59 = vector.broadcast %58 : vector<1x1024xf32> to vector<16x1024xf32>
    %60 = arith.mulf %59, %27 : vector<16x1024xf32>
    %61 = arith.addf %56, %60 : vector<16x1024xf32>
    %c0_28 = arith.constant 0 : index
    %c0_29 = arith.constant 0 : index
    %62 = vector.load %arg11[%c0_28, %c0_29] : memref<16x1024xf32, #tpu.memory_space<vmem>>, vector<16x1024xf32>
    tpu.vector_store %arg11[%c0_28, %c0_29], %61 {strides = array<i32>} : memref<16x1024xf32, #tpu.memory_space<vmem>>, vector<16x1024xf32>,
    return
  }
  func.func @transform_0(%arg0: i32) -> (i32, i32) {
    %c0_i32 = arith.constant 0 : i32
    %c0_i32_0 = arith.constant 0 : i32
    %c0_i32_1 = arith.constant 0 : i32
    return %c0_i32, %c0_i32_0 : i32, i32
  }
  func.func @transform_1(%arg0: i32) -> (i32, i32) {
    %c0_i32 = arith.constant 0 : i32
    %c0_i32_0 = arith.constant 0 : i32
    %c0_i32_1 = arith.constant 0 : i32
    return %c0_i32, %c0_i32_0 : i32, i32
  }
  func.func @transform_2(%arg0: i32) -> (i32, i32) {
    %c0_i32 = arith.constant 0 : i32
    %c0_i32_0 = arith.constant 0 : i32
    %c0_i32_1 = arith.constant 0 : i32
    return %c0_i32, %c0_i32_0 : i32, i32
  }
  func.func @transform_3(%arg0: i32) -> (i32, i32) {
    %c0_i32 = arith.constant 0 : i32
    %c0_i32_0 = arith.constant 0 : i32
    %c0_i32_1 = arith.constant 0 : i32
    return %c0_i32, %c0_i32_0 : i32, i32
  }
  func.func @transform_4(%arg0: i32) -> (i32, i32) {
    %c0_i32 = arith.constant 0 : i32
    %c0_i32_0 = arith.constant 0 : i32
    %c0_i32_1 = arith.constant 0 : i32
    return %c0_i32, %c0_i32_0 : i32, i32
  }
  func.func @transform_5(%arg0: i32) -> (i32, i32) {
    %c0_i32 = arith.constant 0 : i32
    %c0_i32_0 = arith.constant 0 : i32
    %c0_i32_1 = arith.constant 0 : i32
    return %c0_i32, %c0_i32_0 : i32, i32
  }
  func.func @transform_6(%arg0: i32) -> (i32, i32) {
    %c0_i32 = arith.constant 0 : i32
    %c0_i32_0 = arith.constant 0 : i32
    %c0_i32_1 = arith.constant 0 : i32
    return %c0_i32, %c0_i32_0 : i32, i32
  }
  func.func @transform_7(%arg0: i32) -> (i32, i32) {
    %c0_i32 = arith.constant 0 : i32
    %c0_i32_0 = arith.constant 0 : i32
    %c0_i32_1 = arith.constant 0 : i32
    return %c0_i32, %c0_i32_0 : i32, i32
  }
  func.func @transform_8(%arg0: i32) -> (i32, i32) {
    %c0_i32 = arith.constant 0 : i32
    %c0_i32_0 = arith.constant 0 : i32
    %c0_i32_1 = arith.constant 0 : i32
    return %c0_i32, %c0_i32_0 : i32, i32
  }
  func.func @transform_9(%arg0: i32) -> (i32, i32) {
    %c0_i32 = arith.constant 0 : i32
    %c0_i32_0 = arith.constant 0 : i32
    %c0_i32_1 = arith.constant 0 : i32
    return %c0_i32, %c0_i32_0 : i32, i32
  }
  func.func @transform_10(%arg0: i32) -> (i32, i32) {
    %c0_i32 = arith.constant 0 : i32
    %c0_i32_0 = arith.constant 0 : i32
    %c0_i32_1 = arith.constant 0 : i32
    return %c0_i32, %c0_i32_0 : i32, i32
  }
}

</mosaic_0001>

<llo_original>
// kernel: tile.17
$region0: #{tile.17}
  #allocation0 [shape = 's32[1]{0}', space=sflag, size = 0x4, scoped, tag = 'scoped memory for tile.17']
  %s0 = inlined_call_operand.vmem [shape: f32[128], index: 0, kind: input, shape index: {}]
  %s1 = inlined_call_operand.vmem [shape: f32[8,128], index: 1, kind: output, shape index: {}]
  // Predicated region
  $region2: #{tile.17} parent=0 // pred_check
    _
  $region3: #{tile.17} parent=0 // pred_check_branch
    %3 = sbr.rel (0) target = $region5
  $region4: #{tile.17} parent=0 // pred_region
    _
  $region5: #{tile.17} parent=0 // pred_fallthru
    _
  %v4 = vld [vmem:[%s0] ss:$0 sm:$0xff]
  %5 = vst [vmem:[%s1] sm:$0xff] %v4

// kernel: _forward_impl.1
$region0: #{_forward_impl.1}
  #allocation0 [shape = 'u32[]', space=smem, size = 0x4, offset = 0x4, fixed_abs, tag = 'smem constant byte address 0x4 - core index']
  #allocation1 [shape = 'u32[144,128]{1,0:T(1,128)}', space=vmem, size = 0x12000, scoped, tag = 'internal scratch']
  %s0 = inlined_call_operand.vmem [shape: f32[16,14], index: 0, kind: input, shape index: {}]
  %s1 = inlined_call_operand.vmem [shape: f32[14,256], index: 1, kind: input, shape index: {}]
  %s2 = inlined_call_operand.vmem [shape: f32[1,256], index: 2, kind: input, shape index: {}]
  %s3 = inlined_call_operand.vmem [shape: f32[256,256], index: 3, kind: input, shape index: {}]
  %s4 = inlined_call_operand.vmem [shape: f32[1,256], index: 4, kind: input, shape index: {}]
  %s5 = inlined_call_operand.vmem [shape: f32[256,1024], index: 5, kind: input, shape index: {}]
  %s6 = inlined_call_operand.vmem [shape: f32[1,1024], index: 6, kind: input, shape index: {}]
  %s7 = inlined_call_operand.vmem [shape: f32[1,1024], index: 7, kind: input, shape index: {}]
  %s8 = inlined_call_operand.vmem [shape: f32[1,1024], index: 8, kind: input, shape index: {}]
  %s9 = inlined_call_operand.vmem [shape: f32[1,1024], index: 9, kind: input, shape index: {}]
  %s10 = inlined_call_operand.vmem [shape: f32[16,1024], index: 10, kind: output, shape index: {}]
  %s11 = sld [smem:[#allocation0]]
  $region50: #{_forward_impl.1} parent=0
    _
  %s13 = ssub.s32 1, %s11
  %s14 = scalar_select 0, %s13, %s11
  // Predicated region
  $region2: #{_forward_impl.1} parent=0 // pred_check
    _
  $region3: #{_forward_impl.1} parent=0 // pred_check_branch
    %16 = sbr.rel (0) target = $region5
  $region4: #{_forward_impl.1} parent=0 // pred_region
    _
  $region5: #{_forward_impl.1} parent=0 // pred_fallthru
    _
  // Predicated region
  $region6: #{_forward_impl.1} parent=0 // pred_check
    _
  $region7: #{_forward_impl.1} parent=0 // pred_check_branch
    %18 = sbr.rel (0) target = $region9
  $region8: #{_forward_impl.1} parent=0 // pred_region
    _
  $region9: #{_forward_impl.1} parent=0 // pred_fallthru
    _
  // Predicated region
  $region10: #{_forward_impl.1} parent=0 // pred_check
    _
  $region11: #{_forward_impl.1} parent=0 // pred_check_branch
    %20 = sbr.rel (0) target = $region13
  $region12: #{_forward_impl.1} parent=0 // pred_region
    _
  $region13: #{_forward_impl.1} parent=0 // pred_fallthru
    _
  // Predicated region
  $region14: #{_forward_impl.1} parent=0 // pred_check
    _
  $region15: #{_forward_impl.1} parent=0 // pred_check_branch
    %22 = sbr.rel (0) target = $region17
  $region16: #{_forward_impl.1} parent=0 // pred_region
    _
  $region17: #{_forward_impl.1} parent=0 // pred_fallthru
    _
  // Predicated region
  $region18: #{_forward_impl.1} parent=0 // pred_check
    _
  $region19: #{_forward_impl.1} parent=0 // pred_check_branch
    %24 = sbr.rel (0) target = $region21
  $region20: #{_forward_impl.1} parent=0 // pred_region
    _
  $region21: #{_forward_impl.1} parent=0 // pred_fallthru
    _
  // Predicated region
  $region22: #{_forward_impl.1} parent=0 // pred_check
    _
  $region23: #{_forward_impl.1} parent=0 // pred_check_branch
    %26 = sbr.rel (0) target = $region25
  $region24: #{_forward_impl.1} parent=0 // pred_region
    _
  $region25: #{_forward_impl.1} parent=0 // pred_fallthru
    _
  // Predicated region
  $region26: #{_forward_impl.1} parent=0 // pred_check
    _
  $region27: #{_forward_impl.1} parent=0 // pred_check_branch
    %28 = sbr.rel (0) target = $region29
  $region28: #{_forward_impl.1} parent=0 // pred_region
    _
  $region29: #{_forward_impl.1} parent=0 // pred_fallthru
    _
  // Predicated region
  $region30: #{_forward_impl.1} parent=0 // pred_check
    _
  $region31: #{_forward_impl.1} parent=0 // pred_check_branch
    %30 = sbr.rel (0) target = $region33
  $region32: #{_forward_impl.1} parent=0 // pred_region
    _
  $region33: #{_forward_impl.1} parent=0 // pred_fallthru
    _
  // Predicated region
  $region34: #{_forward_impl.1} parent=0 // pred_check
    _
  $region35: #{_forward_impl.1} parent=0 // pred_check_branch
    %32 = sbr.rel (0) target = $region37
  $region36: #{_forward_impl.1} parent=0 // pred_region
    _
  $region37: #{_forward_impl.1} parent=0 // pred_fallthru
    _
  // Predicated region
  $region38: #{_forward_impl.1} parent=0 // pred_check
    _
  $region39: #{_forward_impl.1} parent=0 // pred_check_branch
    %34 = sbr.rel (0) target = $region41
  $region40: #{_forward_impl.1} parent=0 // pred_region
    _
  $region41: #{_forward_impl.1} parent=0 // pred_fallthru
    _
  %v35 = vld [vmem:[%s0] sm:$0xff]
  %v36 = vld [vmem:[%s0 + $0x8] sm:$0xff]
  %v37 = vld [vmem:[%s1] sm:$0xff]
  %v38 = vld [vmem:[%s1 + $0x8] sm:$0xff]
  %v39 = vld [vmem:[%s1 + $0x10] sm:$0x3f]
  %v40 = vld [vmem:[%s1 + $0x18] sm:$0x3f]
  %v41 = vld [vmem:[%s2] sm:$0x3]
  %v43 = vlaneseq
  %v44 = vshrl.u32 %v43, 7
  %v45 = vsub.s32 0, %v44
  %v46 = vrot.slane %v41, %v45
  %v47 = vlaneseq
  %v48 = vshrl.u32 %v47, 7
  %v49 = vsub.s32 1, %v48
  %v50 = vrot.slane %v41, %v49
  %vm53 = vcmask 113664
  %v55 = vsel %vm53, %v35, 0
  %v58 = vsel %vm53, %v36, 0
  %vm60 = vcmask 1045504
  %v62 = vsel %vm60, %v39, 0
  %v65 = vsel %vm60, %v40, 0
  %67 = vmatprep.subr.mxu0 %v38
  %68 = vmatpush1.msra.mxu0 %v37
  %69 = vmatprep.subr.mxu0 %v65
  %70 = vmatpush1.msra.mxu0 %v62
  %71 = vmatprep.subr.mxu0 0.0
  %72 = vmatpush1.msra.mxu0 0.0
  %73 = vmatprep.subr.mxu0 0.0
  %74 = vmatpush1.msra.mxu0 0.0
  %75 = vmatprep.subr.mxu0 0.0
  %76 = vmatpush1.msra.mxu0 0.0
  %77 = vmatprep.subr.mxu0 0.0
  %78 = vmatpush1.msra.mxu0 0.0
  %79 = vmatprep.subr.mxu0 0.0
  %80 = vmatpush1.msra.mxu0 0.0
  %81 = vmatprep.subr.mxu0 0.0
  %82 = vmatpush1.msra.mxu0 0.0
  %83 = vmatprep.subr.mxu0 0.0
  %84 = vmatpush1.msra.mxu0 0.0
  %85 = vmatprep.subr.mxu0 0.0
  %86 = vmatpush1.msra.mxu0 0.0
  %87 = vmatprep.subr.mxu0 0.0
  %88 = vmatpush1.msra.mxu0 0.0
  %89 = vmatprep.subr.mxu0 0.0
  %90 = vmatpush1.msra.mxu0 0.0
  %91 = vmatprep.subr.mxu0 0.0
  %92 = vmatpush1.msra.mxu0 0.0
  %93 = vmatprep.subr.mxu0 0.0
  %94 = vmatpush1.msra.mxu0 0.0
  %95 = vmatprep.subr.mxu0 0.0
  %96 = vmatpush1.msra.mxu0 0.0
  %97 = vmatprep.subr.mxu0 0.0
  %98 = vmatpush1.msra.mxu0 0.0
  %99 = vmatprep.subr.mxu0 0.0
  %100 = vmatpush1.msra.mxu0 0.0
  %101 = vmatprep.subr.mxu0 0.0
  %102 = vmatpush1.msra.mxu0 0.0
  %103 = vmatprep.subr.mxu0 0.0
  %104 = vmatpush1.msra.mxu0 0.0
  %105 = vmatprep.subr.mxu0 0.0
  %106 = vmatpush1.msra.mxu0 0.0
  %107 = vmatprep.subr.mxu0 0.0
  %108 = vmatpush1.msra.mxu0 0.0
  %109 = vmatprep.subr.mxu0 0.0
  %110 = vmatpush1.msra.mxu0 0.0
  %111 = vmatprep.subr.mxu0 0.0
  %112 = vmatpush1.msra.mxu0 0.0
  %113 = vmatprep.subr.mxu0 0.0
  %114 = vmatpush1.msra.mxu0 0.0
  %115 = vmatprep.subr.mxu0 0.0
  %116 = vmatpush1.msra.mxu0 0.0
  %117 = vmatprep.subr.mxu0 0.0
  %118 = vmatpush1.msra.mxu0 0.0
  %119 = vmatprep.subr.mxu0 0.0
  %120 = vmatpush1.msra.mxu0 0.0
  %121 = vmatprep.subr.mxu0 0.0
  %122 = vmatpush1.msra.mxu0 0.0
  %123 = vmatprep.subr.mxu0 0.0
  %124 = vmatpush1.msra.mxu0 0.0
  %125 = vmatprep.subr.mxu0 0.0
  %126 = vmatpush1.msra.mxu0 0.0
  %127 = vmatprep.subr.mxu0 0.0
  %128 = vmatpush1.msra.mxu0 0.0
  %129 = vmatprep.subr.mxu0 0.0
  %130 = vmatpush1.msra.mxu0 0.0
  %131 = vmatprep.mubr.f32.mxu0 0.0
  %132 = vmatmul.mubr.f32.gmra.mrb[0].mxu0 %v55
  %v133 = vpop.f32.mrb[0].mxu0
  %v134 = vadd.f32 %v46, %v133
  %v135 = vpop.f32.mrb[0].mxu0
  %v136 = vadd.f32 %v50, %v135
  %137 = vmatprep.mubr.f32.mxu0 0.0
  %138 = vmatmul.mubr.f32.gmra.mrb[0].mxu0 %v58
  %v139 = vpop.f32.mrb[0].mxu0
  %v140 = vadd.f32 %v46, %v139
  %v141 = vpop.f32.mrb[0].mxu0
  %v142 = vadd.f32 %v50, %v141
  %143 = vdwg.mxu0
  %v144 = vxor.u32 %v134, 2147483648
  %v145 = vxor.u32 %v136, 2147483648
  %v146 = vxor.u32 %v140, 2147483648
  %v147 = vxor.u32 %v142, 2147483648
  %v148 = vmul.f32 %v144, 1.442695
  %v149 = vpow.pop %v148
  %v150 = vmul.f32 %v145, 1.442695
  %v151 = vpow.pop %v150
  %v152 = vmul.f32 %v146, 1.442695
  %v153 = vpow.pop %v152
  %v154 = vmul.f32 %v147, 1.442695
  %v155 = vpow.pop %v154
  %v156 = vadd.f32 %v149, 1.0
  %v157 = vadd.f32 %v151, 1.0
  %v158 = vadd.f32 %v153, 1.0
  %v159 = vadd.f32 %v155, 1.0
  %v160 = vrcp.pop %v156
  %v161 = vmul.f32 1.0, %v160
  %v162 = vrcp.pop %v157
  %v163 = vmul.f32 1.0, %v162
  %v164 = vrcp.pop %v158
  %v165 = vmul.f32 1.0, %v164
  %v166 = vrcp.pop %v159
  %v167 = vmul.f32 1.0, %v166
  %v168 = vmul.f32 %v134, %v161
  %v169 = vmul.f32 %v136, %v163
  %v170 = vmul.f32 %v140, %v165
  %v171 = vmul.f32 %v142, %v167
  %v172 = vld [vmem:[%s3] sm:$0xff]
  %v173 = vld [vmem:[%s3 + $0x8] sm:$0xff]
  %v174 = vld [vmem:[%s3 + $0x10] sm:$0xff]
  %v175 = vld [vmem:[%s3 + $0x18] sm:$0xff]
  %v176 = vld [vmem:[%s3 + $0x20] sm:$0xff]
  %v177 = vld [vmem:[%s3 + $0x28] sm:$0xff]
  %v178 = vld [vmem:[%s3 + $0x30] sm:$0xff]
  %v179 = vld [vmem:[%s3 + $0x38] sm:$0xff]
  %v180 = vld [vmem:[%s3 + $0x40] sm:$0xff]
  %v181 = vld [vmem:[%s3 + $0x48] sm:$0xff]
  %v182 = vld [vmem:[%s3 + $0x50] sm:$0xff]
  %v183 = vld [vmem:[%s3 + $0x58] sm:$0xff]
  %v184 = vld [vmem:[%s3 + $0x60] sm:$0xff]
  %v185 = vld [vmem:[%s3 + $0x68] sm:$0xff]
  %v186 = vld [vmem:[%s3 + $0x70] sm:$0xff]
  %v187 = vld [vmem:[%s3 + $0x78] sm:$0xff]
  %v188 = vld [vmem:[%s3 + $0x80] sm:$0xff]
  %v189 = vld [vmem:[%s3 + $0x88] sm:$0xff]
  %v190 = vld [vmem:[%s3 + $0x90] sm:$0xff]
  %v191 = vld [vmem:[%s3 + $0x98] sm:$0xff]
  %v192 = vld [vmem:[%s3 + $0xa0] sm:$0xff]
  %v193 = vld [vmem:[%s3 + $0xa8] sm:$0xff]
  %v194 = vld [vmem:[%s3 + $0xb0] sm:$0xff]
  %v195 = vld [vmem:[%s3 + $0xb8] sm:$0xff]
  %v196 = vld [vmem:[%s3 + $0xc0] sm:$0xff]
  %v197 = vld [vmem:[%s3 + $0xc8] sm:$0xff]
  %v198 = vld [vmem:[%s3 + $0xd0] sm:$0xff]
  %v199 = vld [vmem:[%s3 + $0xd8] sm:$0xff]
  %v200 = vld [vmem:[%s3 + $0xe0] sm:$0xff]
  %v201 = vld [vmem:[%s3 + $0xe8] sm:$0xff]
  %v202 = vld [vmem:[%s3 + $0xf0] sm:$0xff]
  %v203 = vld [vmem:[%s3 + $0xf8] sm:$0xff]
  %v204 = vld [vmem:[%s3 + $0x100] sm:$0xff]
  %v205 = vld [vmem:[%s3 + $0x108] sm:$0xff]
  %v206 = vld [vmem:[%s3 + $0x110] sm:$0xff]
  %v207 = vld [vmem:[%s3 + $0x118] sm:$0xff]
  %v208 = vld [vmem:[%s3 + $0x120] sm:$0xff]
  %v209 = vld [vmem:[%s3 + $0x128] sm:$0xff]
  %v210 = vld [vmem:[%s3 + $0x130] sm:$0xff]
  %v211 = vld [vmem:[%s3 + $0x138] sm:$0xff]
  %v212 = vld [vmem:[%s3 + $0x140] sm:$0xff]
  %v213 = vld [vmem:[%s3 + $0x148] sm:$0xff]
  %v214 = vld [vmem:[%s3 + $0x150] sm:$0xff]
  %v215 = vld [vmem:[%s3 + $0x158] sm:$0xff]
  %v216 = vld [vmem:[%s3 + $0x160] sm:$0xff]
  %v217 = vld [vmem:[%s3 + $0x168] sm:$0xff]
  %v218 = vld [vmem:[%s3 + $0x170] sm:$0xff]
  %v219 = vld [vmem:[%s3 + $0x178] sm:$0xff]
  %v220 = vld [vmem:[%s3 + $0x180] sm:$0xff]
  %v221 = vld [vmem:[%s3 + $0x188] sm:$0xff]
  %v222 = vld [vmem:[%s3 + $0x190] sm:$0xff]
  %v223 = vld [vmem:[%s3 + $0x198] sm:$0xff]
  %v224 = vld [vmem:[%s3 + $0x1a0] sm:$0xff]
  %v225 = vld [vmem:[%s3 + $0x1a8] sm:$0xff]
  %v226 = vld [vmem:[%s3 + $0x1b0] sm:$0xff]
  %v227 = vld [vmem:[%s3 + $0x1b8] sm:$0xff]
  %v228 = vld [vmem:[%s3 + $0x1c0] sm:$0xff]
  %v229 = vld [vmem:[%s3 + $0x1c8] sm:$0xff]
  %v230 = vld [vmem:[%s3 + $0x1d0] sm:$0xff]
  %v231 = vld [vmem:[%s3 + $0x1d8] sm:$0xff]
  %v232 = vld [vmem:[%s3 + $0x1e0] sm:$0xff]
  %v233 = vld [vmem:[%s3 + $0x1e8] sm:$0xff]
  %v234 = vld [vmem:[%s3 + $0x1f0] sm:$0xff]
  %v235 = vld [vmem:[%s3 + $0x1f8] sm:$0xff]
  %v236 = vld [vmem:[%s4] sm:$0x3]
  %v238 = vlaneseq
  %v239 = vshrl.u32 %v238, 7
  %v240 = vsub.s32 0, %v239
  %v241 = vrot.slane %v236, %v240
  %v242 = vlaneseq
  %v243 = vshrl.u32 %v242, 7
  %v244 = vsub.s32 1, %v243
  %v245 = vrot.slane %v236, %v244
  %248 = vmatprep.subr.mxu0 %v173
  %249 = vmatpush1.msra.mxu0 %v172
  %250 = vmatprep.subr.mxu0 %v175
  %251 = vmatpush1.msra.mxu0 %v174
  %252 = vmatprep.subr.mxu0 %v177
  %253 = vmatpush1.msra.mxu0 %v176
  %254 = vmatprep.subr.mxu0 %v179
  %255 = vmatpush1.msra.mxu0 %v178
  %256 = vmatprep.subr.mxu0 %v181
  %257 = vmatpush1.msra.mxu0 %v180
  %258 = vmatprep.subr.mxu0 %v183
  %259 = vmatpush1.msra.mxu0 %v182
  %260 = vmatprep.subr.mxu0 %v185
  %261 = vmatpush1.msra.mxu0 %v184
  %262 = vmatprep.subr.mxu0 %v187
  %263 = vmatpush1.msra.mxu0 %v186
  %264 = vmatprep.subr.mxu0 %v189
  %265 = vmatpush1.msra.mxu0 %v188
  %266 = vmatprep.subr.mxu0 %v191
  %267 = vmatpush1.msra.mxu0 %v190
  %268 = vmatprep.subr.mxu0 %v193
  %269 = vmatpush1.msra.mxu0 %v192
  %270 = vmatprep.subr.mxu0 %v195
  %271 = vmatpush1.msra.mxu0 %v194
  %272 = vmatprep.subr.mxu0 %v197
  %273 = vmatpush1.msra.mxu0 %v196
  %274 = vmatprep.subr.mxu0 %v199
  %275 = vmatpush1.msra.mxu0 %v198
  %276 = vmatprep.subr.mxu0 %v201
  %277 = vmatpush1.msra.mxu0 %v200
  %278 = vmatprep.subr.mxu0 %v203
  %279 = vmatpush1.msra.mxu0 %v202
  %280 = vmatprep.subr.mxu0 %v205
  %281 = vmatpush1.msra.mxu0 %v204
  %282 = vmatprep.subr.mxu0 %v207
  %283 = vmatpush1.msra.mxu0 %v206
  %284 = vmatprep.subr.mxu0 %v209
  %285 = vmatpush1.msra.mxu0 %v208
  %286 = vmatprep.subr.mxu0 %v211
  %287 = vmatpush1.msra.mxu0 %v210
  %288 = vmatprep.subr.mxu0 %v213
  %289 = vmatpush1.msra.mxu0 %v212
  %290 = vmatprep.subr.mxu0 %v215
  %291 = vmatpush1.msra.mxu0 %v214
  %292 = vmatprep.subr.mxu0 %v217
  %293 = vmatpush1.msra.mxu0 %v216
  %294 = vmatprep.subr.mxu0 %v219
  %295 = vmatpush1.msra.mxu0 %v218
  %296 = vmatprep.subr.mxu0 %v221
  %297 = vmatpush1.msra.mxu0 %v220
  %298 = vmatprep.subr.mxu0 %v223
  %299 = vmatpush1.msra.mxu0 %v222
  %300 = vmatprep.subr.mxu0 %v225
  %301 = vmatpush1.msra.mxu0 %v224
  %302 = vmatprep.subr.mxu0 %v227
  %303 = vmatpush1.msra.mxu0 %v226
  %304 = vmatprep.subr.mxu0 %v229
  %305 = vmatpush1.msra.mxu0 %v228
  %306 = vmatprep.subr.mxu0 %v231
  %307 = vmatpush1.msra.mxu0 %v230
  %308 = vmatprep.subr.mxu0 %v233
  %309 = vmatpush1.msra.mxu0 %v232
  %310 = vmatprep.subr.mxu0 %v235
  %311 = vmatpush1.msra.mxu0 %v234
  %312 = vmatprep.mubr.f32.mxu0 %v169
  %313 = vmatmul.mubr.f32.gmra.mrb[0].mxu0 %v168
  %v314 = vpop.f32.mrb[0].mxu0
  %v315 = vadd.f32 %v241, %v314
  %v316 = vpop.f32.mrb[0].mxu0
  %v317 = vadd.f32 %v245, %v316
  %318 = vmatprep.mubr.f32.mxu0 %v171
  %319 = vmatmul.mubr.f32.gmra.mrb[0].mxu0 %v170
  %v320 = vpop.f32.mrb[0].mxu0
  %v321 = vadd.f32 %v241, %v320
  %v322 = vpop.f32.mrb[0].mxu0
  %v323 = vadd.f32 %v245, %v322
  %324 = vdwg.mxu0
  %v325 = vxor.u32 %v315, 2147483648
  %v326 = vxor.u32 %v317, 2147483648
  %v327 = vxor.u32 %v321, 2147483648
  %v328 = vxor.u32 %v323, 2147483648
  %v329 = vmul.f32 %v325, 1.442695
  %v330 = vpow.pop %v329
  %v331 = vmul.f32 %v326, 1.442695
  %v332 = vpow.pop %v331
  %v333 = vmul.f32 %v327, 1.442695
  %v334 = vpow.pop %v333
  %v335 = vmul.f32 %v328, 1.442695
  %v336 = vpow.pop %v335
  %v337 = vadd.f32 %v330, 1.0
  %v338 = vadd.f32 %v332, 1.0
  %v339 = vadd.f32 %v334, 1.0
  %v340 = vadd.f32 %v336, 1.0
  %v341 = vrcp.pop %v337
  %v342 = vmul.f32 1.0, %v341
  %v343 = vrcp.pop %v338
  %v344 = vmul.f32 1.0, %v343
  %v345 = vrcp.pop %v339
  %v346 = vmul.f32 1.0, %v345
  %v347 = vrcp.pop %v340
  %v348 = vmul.f32 1.0, %v347
  %v349 = vmul.f32 %v315, %v342
  %v350 = vmul.f32 %v317, %v344
  %v351 = vmul.f32 %v321, %v346
  %v352 = vmul.f32 %v323, %v348
  %v353 = vld [vmem:[%s5] sm:$0xff]
  %v354 = vld [vmem:[%s5 + $0x8] sm:$0xff]
  %v355 = vld [vmem:[%s5 + $0x10] sm:$0xff]
  %v356 = vld [vmem:[%s5 + $0x18] sm:$0xff]
  %v357 = vld [vmem:[%s5 + $0x20] sm:$0xff]
  %v358 = vld [vmem:[%s5 + $0x28] sm:$0xff]
  %v359 = vld [vmem:[%s5 + $0x30] sm:$0xff]
  %v360 = vld [vmem:[%s5 + $0x38] sm:$0xff]
  %v361 = vld [vmem:[%s5 + $0x40] sm:$0xff]
  %v362 = vld [vmem:[%s5 + $0x48] sm:$0xff]
  %v363 = vld [vmem:[%s5 + $0x50] sm:$0xff]
  %v364 = vld [vmem:[%s5 + $0x58] sm:$0xff]
  %v365 = vld [vmem:[%s5 + $0x60] sm:$0xff]
  %v366 = vld [vmem:[%s5 + $0x68] sm:$0xff]
  %v367 = vld [vmem:[%s5 + $0x70] sm:$0xff]
  %v368 = vld [vmem:[%s5 + $0x78] sm:$0xff]
  %v369 = vld [vmem:[%s5 + $0x80] sm:$0xff]
  %v370 = vld [vmem:[%s5 + $0x88] sm:$0xff]
  %v371 = vld [vmem:[%s5 + $0x90] sm:$0xff]
  %v372 = vld [vmem:[%s5 + $0x98] sm:$0xff]
  %v373 = vld [vmem:[%s5 + $0xa0] sm:$0xff]
  %v374 = vld [vmem:[%s5 + $0xa8] sm:$0xff]
  %v375 = vld [vmem:[%s5 + $0xb0] sm:$0xff]
  %v376 = vld [vmem:[%s5 + $0xb8] sm:$0xff]
  %v377 = vld [vmem:[%s5 + $0xc0] sm:$0xff]
  %v378 = vld [vmem:[%s5 + $0xc8] sm:$0xff]
  %v379 = vld [vmem:[%s5 + $0xd0] sm:$0xff]
  %v380 = vld [vmem:[%s5 + $0xd8] sm:$0xff]
  %v381 = vld [vmem:[%s5 + $0xe0] sm:$0xff]
  %v382 = vld [vmem:[%s5 + $0xe8] sm:$0xff]
  %v383 = vld [vmem:[%s5 + $0xf0] sm:$0xff]
  %v384 = vld [vmem:[%s5 + $0xf8] sm:$0xff]
  %v385 = vld [vmem:[%s5 + $0x100] sm:$0xff]
  %v386 = vld [vmem:[%s5 + $0x108] sm:$0xff]
  %v387 = vld [vmem:[%s5 + $0x110] sm:$0xff]
  %v388 = vld [vmem:[%s5 + $0x118] sm:$0xff]
  %v389 = vld [vmem:[%s5 + $0x120] sm:$0xff]
  %v390 = vld [vmem:[%s5 + $0x128] sm:$0xff]
  %v391 = vld [vmem:[%s5 + $0x130] sm:$0xff]
  %v392 = vld [vmem:[%s5 + $0x138] sm:$0xff]
  %v393 = vld [vmem:[%s5 + $0x140] sm:$0xff]
  %v394 = vld [vmem:[%s5 + $0x148] sm:$0xff]
  %v395 = vld [vmem:[%s5 + $0x150] sm:$0xff]
  %v396 = vld [vmem:[%s5 + $0x158] sm:$0xff]
  %v397 = vld [vmem:[%s5 + $0x160] sm:$0xff]
  %v398 = vld [vmem:[%s5 + $0x168] sm:$0xff]
  %v399 = vld [vmem:[%s5 + $0x170] sm:$0xff]
  %v400 = vld [vmem:[%s5 + $0x178] sm:$0xff]
  %v401 = vld [vmem:[%s5 + $0x180] sm:$0xff]
  %v402 = vld [vmem:[%s5 + $0x188] sm:$0xff]
  %v403 = vld [vmem:[%s5 + $0x190] sm:$0xff]
  %v404 = vld [vmem:[%s5 + $0x198] sm:$0xff]
  %v405 = vld [vmem:[%s5 + $0x1a0] sm:$0xff]
  %v406 = vld [vmem:[%s5 + $0x1a8] sm:$0xff]
  %v407 = vld [vmem:[%s5 + $0x1b0] sm:$0xff]
  %v408 = vld [vmem:[%s5 + $0x1b8] sm:$0xff]
  %v409 = vld [vmem:[%s5 + $0x1c0] sm:$0xff]
  %v410 = vld [vmem:[%s5 + $0x1c8] sm:$0xff]
  %v411 = vld [vmem:[%s5 + $0x1d0] sm:$0xff]
  %v412 = vld [vmem:[%s5 + $0x1d8] sm:$0xff]
  %v413 = vld [vmem:[%s5 + $0x1e0] sm:$0xff]
  %v414 = vld [vmem:[%s5 + $0x1e8] sm:$0xff]
  %v415 = vld [vmem:[%s5 + $0x1f0] sm:$0xff]
  %v416 = vld [vmem:[%s5 + $0x1f8] sm:$0xff]
  %v417 = vld [vmem:[%s5 + $0x200] sm:$0xff]
  %v418 = vld [vmem:[%s5 + $0x208] sm:$0xff]
  %v419 = vld [vmem:[%s5 + $0x210] sm:$0xff]
  %v420 = vld [vmem:[%s5 + $0x218] sm:$0xff]
  %v421 = vld [vmem:[%s5 + $0x220] sm:$0xff]
  %v422 = vld [vmem:[%s5 + $0x228] sm:$0xff]
  %v423 = vld [vmem:[%s5 + $0x230] sm:$0xff]
  %v424 = vld [vmem:[%s5 + $0x238] sm:$0xff]
  %v425 = vld [vmem:[%s5 + $0x240] sm:$0xff]
  %v426 = vld [vmem:[%s5 + $0x248] sm:$0xff]
  %v427 = vld [vmem:[%s5 + $0x250] sm:$0xff]
  %v428 = vld [vmem:[%s5 + $0x258] sm:$0xff]
  %v429 = vld [vmem:[%s5 + $0x260] sm:$0xff]
  %v430 = vld [vmem:[%s5 + $0x268] sm:$0xff]
  %v431 = vld [vmem:[%s5 + $0x270] sm:$0xff]
  %v432 = vld [vmem:[%s5 + $0x278] sm:$0xff]
  %v433 = vld [vmem:[%s5 + $0x280] sm:$0xff]
  %v434 = vld [vmem:[%s5 + $0x288] sm:$0xff]
  %v435 = vld [vmem:[%s5 + $0x290] sm:$0xff]
  %v436 = vld [vmem:[%s5 + $0x298] sm:$0xff]
  %v437 = vld [vmem:[%s5 + $0x2a0] sm:$0xff]
  %v438 = vld [vmem:[%s5 + $0x2a8] sm:$0xff]
  %v439 = vld [vmem:[%s5 + $0x2b0] sm:$0xff]
  %v440 = vld [vmem:[%s5 + $0x2b8] sm:$0xff]
  %v441 = vld [vmem:[%s5 + $0x2c0] sm:$0xff]
  %v442 = vld [vmem:[%s5 + $0x2c8] sm:$0xff]
  %v443 = vld [vmem:[%s5 + $0x2d0] sm:$0xff]
  %v444 = vld [vmem:[%s5 + $0x2d8] sm:$0xff]
  %v445 = vld [vmem:[%s5 + $0x2e0] sm:$0xff]
  %v446 = vld [vmem:[%s5 + $0x2e8] sm:$0xff]
  %v447 = vld [vmem:[%s5 + $0x2f0] sm:$0xff]
  %v448 = vld [vmem:[%s5 + $0x2f8] sm:$0xff]
  %v449 = vld [vmem:[%s5 + $0x300] sm:$0xff]
  %v450 = vld [vmem:[%s5 + $0x308] sm:$0xff]
  %v451 = vld [vmem:[%s5 + $0x310] sm:$0xff]
  %v452 = vld [vmem:[%s5 + $0x318] sm:$0xff]
  %v453 = vld [vmem:[%s5 + $0x320] sm:$0xff]
  %v454 = vld [vmem:[%s5 + $0x328] sm:$0xff]
  %v455 = vld [vmem:[%s5 + $0x330] sm:$0xff]
  %v456 = vld [vmem:[%s5 + $0x338] sm:$0xff]
  %v457 = vld [vmem:[%s5 + $0x340] sm:$0xff]
  %v458 = vld [vmem:[%s5 + $0x348] sm:$0xff]
  %v459 = vld [vmem:[%s5 + $0x350] sm:$0xff]
  %v460 = vld [vmem:[%s5 + $0x358] sm:$0xff]
  %v461 = vld [vmem:[%s5 + $0x360] sm:$0xff]
  %v462 = vld [vmem:[%s5 + $0x368] sm:$0xff]
  %v463 = vld [vmem:[%s5 + $0x370] sm:$0xff]
  %v464 = vld [vmem:[%s5 + $0x378] sm:$0xff]
  %v465 = vld [vmem:[%s5 + $0x380] sm:$0xff]
  %v466 = vld [vmem:[%s5 + $0x388] sm:$0xff]
  %v467 = vld [vmem:[%s5 + $0x390] sm:$0xff]
  %v468 = vld [vmem:[%s5 + $0x398] sm:$0xff]
  %v469 = vld [vmem:[%s5 + $0x3a0] sm:$0xff]
  %v470 = vld [vmem:[%s5 + $0x3a8] sm:$0xff]
  %v471 = vld [vmem:[%s5 + $0x3b0] sm:$0xff]
  %v472 = vld [vmem:[%s5 + $0x3b8] sm:$0xff]
  %v473 = vld [vmem:[%s5 + $0x3c0] sm:$0xff]
  %v474 = vld [vmem:[%s5 + $0x3c8] sm:$0xff]
  %v475 = vld [vmem:[%s5 + $0x3d0] sm:$0xff]
  %v476 = vld [vmem:[%s5 + $0x3d8] sm:$0xff]
  %v477 = vld [vmem:[%s5 + $0x3e0] sm:$0xff]
  %v478 = vld [vmem:[%s5 + $0x3e8] sm:$0xff]
  %v479 = vld [vmem:[%s5 + $0x3f0] sm:$0xff]
  %v480 = vld [vmem:[%s5 + $0x3f8] sm:$0xff]
  %v481 = vld [vmem:[%s5 + $0x400] sm:$0xff]
  %v482 = vld [vmem:[%s5 + $0x408] sm:$0xff]
  %v483 = vld [vmem:[%s5 + $0x410] sm:$0xff]
  %v484 = vld [vmem:[%s5 + $0x418] sm:$0xff]
  %v485 = vld [vmem:[%s5 + $0x420] sm:$0xff]
  %v486 = vld [vmem:[%s5 + $0x428] sm:$0xff]
  %v487 = vld [vmem:[%s5 + $0x430] sm:$0xff]
  %v488 = vld [vmem:[%s5 + $0x438] sm:$0xff]
  %v489 = vld [vmem:[%s5 + $0x440] sm:$0xff]
  %v490 = vld [vmem:[%s5 + $0x448] sm:$0xff]
  %v491 = vld [vmem:[%s5 + $0x450] sm:$0xff]
  %v492 = vld [vmem:[%s5 + $0x458] sm:$0xff]
  %v493 = vld [vmem:[%s5 + $0x460] sm:$0xff]
  %v494 = vld [vmem:[%s5 + $0x468] sm:$0xff]
  %v495 = vld [vmem:[%s5 + $0x470] sm:$0xff]
  %v496 = vld [vmem:[%s5 + $0x478] sm:$0xff]
  %v497 = vld [vmem:[%s5 + $0x480] sm:$0xff]
  %v498 = vld [vmem:[%s5 + $0x488] sm:$0xff]
  %v499 = vld [vmem:[%s5 + $0x490] sm:$0xff]
  %v500 = vld [vmem:[%s5 + $0x498] sm:$0xff]
  %v501 = vld [vmem:[%s5 + $0x4a0] sm:$0xff]
  %v502 = vld [vmem:[%s5 + $0x4a8] sm:$0xff]
  %v503 = vld [vmem:[%s5 + $0x4b0] sm:$0xff]
  %v504 = vld [vmem:[%s5 + $0x4b8] sm:$0xff]
  %v505 = vld [vmem:[%s5 + $0x4c0] sm:$0xff]
  %v506 = vld [vmem:[%s5 + $0x4c8] sm:$0xff]
  %v507 = vld [vmem:[%s5 + $0x4d0] sm:$0xff]
  %v508 = vld [vmem:[%s5 + $0x4d8] sm:$0xff]
  %v509 = vld [vmem:[%s5 + $0x4e0] sm:$0xff]
  %v510 = vld [vmem:[%s5 + $0x4e8] sm:$0xff]
  %v511 = vld [vmem:[%s5 + $0x4f0] sm:$0xff]
  %v512 = vld [vmem:[%s5 + $0x4f8] sm:$0xff]
  %v513 = vld [vmem:[%s5 + $0x500] sm:$0xff]
  %v514 = vld [vmem:[%s5 + $0x508] sm:$0xff]
  %v515 = vld [vmem:[%s5 + $0x510] sm:$0xff]
  %v516 = vld [vmem:[%s5 + $0x518] sm:$0xff]
  %v517 = vld [vmem:[%s5 + $0x520] sm:$0xff]
  %v518 = vld [vmem:[%s5 + $0x528] sm:$0xff]
  %v519 = vld [vmem:[%s5 + $0x530] sm:$0xff]
  %v520 = vld [vmem:[%s5 + $0x538] sm:$0xff]
  %v521 = vld [vmem:[%s5 + $0x540] sm:$0xff]
  %v522 = vld [vmem:[%s5 + $0x548] sm:$0xff]
  %v523 = vld [vmem:[%s5 + $0x550] sm:$0xff]
  %v524 = vld [vmem:[%s5 + $0x558] sm:$0xff]
  %v525 = vld [vmem:[%s5 + $0x560] sm:$0xff]
  %v526 = vld [vmem:[%s5 + $0x568] sm:$0xff]
  %v527 = vld [vmem:[%s5 + $0x570] sm:$0xff]
  %v528 = vld [vmem:[%s5 + $0x578] sm:$0xff]
  %v529 = vld [vmem:[%s5 + $0x580] sm:$0xff]
  %v530 = vld [vmem:[%s5 + $0x588] sm:$0xff]
  %v531 = vld [vmem:[%s5 + $0x590] sm:$0xff]
  %v532 = vld [vmem:[%s5 + $0x598] sm:$0xff]
  %v533 = vld [vmem:[%s5 + $0x5a0] sm:$0xff]
  %v534 = vld [vmem:[%s5 + $0x5a8] sm:$0xff]
  %v535 = vld [vmem:[%s5 + $0x5b0] sm:$0xff]
  %v536 = vld [vmem:[%s5 + $0x5b8] sm:$0xff]
  %v537 = vld [vmem:[%s5 + $0x5c0] sm:$0xff]
  %v538 = vld [vmem:[%s5 + $0x5c8] sm:$0xff]
  %v539 = vld [vmem:[%s5 + $0x5d0] sm:$0xff]
  %v540 = vld [vmem:[%s5 + $0x5d8] sm:$0xff]
  %v541 = vld [vmem:[%s5 + $0x5e0] sm:$0xff]
  %v542 = vld [vmem:[%s5 + $0x5e8] sm:$0xff]
  %v543 = vld [vmem:[%s5 + $0x5f0] sm:$0xff]
  %v544 = vld [vmem:[%s5 + $0x5f8] sm:$0xff]
  %v545 = vld [vmem:[%s5 + $0x600] sm:$0xff]
  %v546 = vld [vmem:[%s5 + $0x608] sm:$0xff]
  %v547 = vld [vmem:[%s5 + $0x610] sm:$0xff]
  %v548 = vld [vmem:[%s5 + $0x618] sm:$0xff]
  %v549 = vld [vmem:[%s5 + $0x620] sm:$0xff]
  %v550 = vld [vmem:[%s5 + $0x628] sm:$0xff]
  %v551 = vld [vmem:[%s5 + $0x630] sm:$0xff]
  %v552 = vld [vmem:[%s5 + $0x638] sm:$0xff]
  %v553 = vld [vmem:[%s5 + $0x640] sm:$0xff]
  %v554 = vld [vmem:[%s5 + $0x648] sm:$0xff]
  %v555 = vld [vmem:[%s5 + $0x650] sm:$0xff]
  %v556 = vld [vmem:[%s5 + $0x658] sm:$0xff]
  %v557 = vld [vmem:[%s5 + $0x660] sm:$0xff]
  %v558 = vld [vmem:[%s5 + $0x668] sm:$0xff]
  %v559 = vld [vmem:[%s5 + $0x670] sm:$0xff]
  %v560 = vld [vmem:[%s5 + $0x678] sm:$0xff]
  %v561 = vld [vmem:[%s5 + $0x680] sm:$0xff]
  %v562 = vld [vmem:[%s5 + $0x688] sm:$0xff]
  %v563 = vld [vmem:[%s5 + $0x690] sm:$0xff]
  %v564 = vld [vmem:[%s5 + $0x698] sm:$0xff]
  %v565 = vld [vmem:[%s5 + $0x6a0] sm:$0xff]
  %v566 = vld [vmem:[%s5 + $0x6a8] sm:$0xff]
  %v567 = vld [vmem:[%s5 + $0x6b0] sm:$0xff]
  %v568 = vld [vmem:[%s5 + $0x6b8] sm:$0xff]
  %v569 = vld [vmem:[%s5 + $0x6c0] sm:$0xff]
  %v570 = vld [vmem:[%s5 + $0x6c8] sm:$0xff]
  %v571 = vld [vmem:[%s5 + $0x6d0] sm:$0xff]
  %v572 = vld [vmem:[%s5 + $0x6d8] sm:$0xff]
  %v573 = vld [vmem:[%s5 + $0x6e0] sm:$0xff]
  %v574 = vld [vmem:[%s5 + $0x6e8] sm:$0xff]
  %v575 = vld [vmem:[%s5 + $0x6f0] sm:$0xff]
  %v576 = vld [vmem:[%s5 + $0x6f8] sm:$0xff]
  %v577 = vld [vmem:[%s5 + $0x700] sm:$0xff]
  %v578 = vld [vmem:[%s5 + $0x708] sm:$0xff]
  %v579 = vld [vmem:[%s5 + $0x710] sm:$0xff]
  %v580 = vld [vmem:[%s5 + $0x718] sm:$0xff]
  %v581 = vld [vmem:[%s5 + $0x720] sm:$0xff]
  %v582 = vld [vmem:[%s5 + $0x728] sm:$0xff]
  %v583 = vld [vmem:[%s5 + $0x730] sm:$0xff]
  %v584 = vld [vmem:[%s5 + $0x738] sm:$0xff]
  %v585 = vld [vmem:[%s5 + $0x740] sm:$0xff]
  %v586 = vld [vmem:[%s5 + $0x748] sm:$0xff]
  %v587 = vld [vmem:[%s5 + $0x750] sm:$0xff]
  %v588 = vld [vmem:[%s5 + $0x758] sm:$0xff]
  %v589 = vld [vmem:[%s5 + $0x760] sm:$0xff]
  %v590 = vld [vmem:[%s5 + $0x768] sm:$0xff]
  %v591 = vld [vmem:[%s5 + $0x770] sm:$0xff]
  %v592 = vld [vmem:[%s5 + $0x778] sm:$0xff]
  %v593 = vld [vmem:[%s5 + $0x780] sm:$0xff]
  %v594 = vld [vmem:[%s5 + $0x788] sm:$0xff]
  %v595 = vld [vmem:[%s5 + $0x790] sm:$0xff]
  %v596 = vld [vmem:[%s5 + $0x798] sm:$0xff]
  %v597 = vld [vmem:[%s5 + $0x7a0] sm:$0xff]
  %v598 = vld [vmem:[%s5 + $0x7a8] sm:$0xff]
  %v599 = vld [vmem:[%s5 + $0x7b0] sm:$0xff]
  %v600 = vld [vmem:[%s5 + $0x7b8] sm:$0xff]
  %v601 = vld [vmem:[%s5 + $0x7c0] sm:$0xff]
  %v602 = vld [vmem:[%s5 + $0x7c8] sm:$0xff]
  %v603 = vld [vmem:[%s5 + $0x7d0] sm:$0xff]
  %v604 = vld [vmem:[%s5 + $0x7d8] sm:$0xff]
  %v605 = vld [vmem:[%s5 + $0x7e0] sm:$0xff]
  %v606 = vld [vmem:[%s5 + $0x7e8] sm:$0xff]
  %v607 = vld [vmem:[%s5 + $0x7f0] sm:$0xff]
  %v608 = vld [vmem:[%s5 + $0x7f8] sm:$0xff]
  %v609 = vld [vmem:[%s6] sm:$0xff]
  %v611 = vlaneseq
  %v612 = vshrl.u32 %v611, 7
  %v613 = vsub.s32 0, %v612
  %v614 = vrot.slane %v609, %v613
  %v615 = vlaneseq
  %v616 = vshrl.u32 %v615, 7
  %v617 = vsub.s32 1, %v616
  %v618 = vrot.slane %v609, %v617
  %v619 = vlaneseq
  %v620 = vshrl.u32 %v619, 7
  %v621 = vsub.s32 2, %v620
  %v622 = vrot.slane %v609, %v621
  %v623 = vlaneseq
  %v624 = vshrl.u32 %v623, 7
  %v625 = vsub.s32 3, %v624
  %v626 = vrot.slane %v609, %v625
  %v627 = vlaneseq
  %v628 = vshrl.u32 %v627, 7
  %v629 = vsub.s32 4, %v628
  %v630 = vrot.slane %v609, %v629
  %v631 = vlaneseq
  %v632 = vshrl.u32 %v631, 7
  %v633 = vsub.s32 5, %v632
  %v634 = vrot.slane %v609, %v633
  %v635 = vlaneseq
  %v636 = vshrl.u32 %v635, 7
  %v637 = vsub.s32 6, %v636
  %v638 = vrot.slane %v609, %v637
  %v639 = vlaneseq
  %v640 = vshrl.u32 %v639, 7
  %v641 = vsub.s32 7, %v640
  %v642 = vrot.slane %v609, %v641
  %651 = vmatprep.subr.mxu0 %v354
  %652 = vmatpush1.msra.mxu0 %v353
  %653 = vmatprep.subr.mxu0 %v362
  %654 = vmatpush1.msra.mxu0 %v361
  %655 = vmatprep.subr.mxu0 %v370
  %656 = vmatpush1.msra.mxu0 %v369
  %657 = vmatprep.subr.mxu0 %v378
  %658 = vmatpush1.msra.mxu0 %v377
  %659 = vmatprep.subr.mxu0 %v386
  %660 = vmatpush1.msra.mxu0 %v385
  %661 = vmatprep.subr.mxu0 %v394
  %662 = vmatpush1.msra.mxu0 %v393
  %663 = vmatprep.subr.mxu0 %v402
  %664 = vmatpush1.msra.mxu0 %v401
  %665 = vmatprep.subr.mxu0 %v410
  %666 = vmatpush1.msra.mxu0 %v409
  %667 = vmatprep.subr.mxu0 %v418
  %668 = vmatpush1.msra.mxu0 %v417
  %669 = vmatprep.subr.mxu0 %v426
  %670 = vmatpush1.msra.mxu0 %v425
  %671 = vmatprep.subr.mxu0 %v434
  %672 = vmatpush1.msra.mxu0 %v433
  %673 = vmatprep.subr.mxu0 %v442
  %674 = vmatpush1.msra.mxu0 %v441
  %675 = vmatprep.subr.mxu0 %v450
  %676 = vmatpush1.msra.mxu0 %v449
  %677 = vmatprep.subr.mxu0 %v458
  %678 = vmatpush1.msra.mxu0 %v457
  %679 = vmatprep.subr.mxu0 %v466
  %680 = vmatpush1.msra.mxu0 %v465
  %681 = vmatprep.subr.mxu0 %v474
  %682 = vmatpush1.msra.mxu0 %v473
  %683 = vmatprep.subr.mxu0 %v482
  %684 = vmatpush1.msra.mxu0 %v481
  %685 = vmatprep.subr.mxu0 %v490
  %686 = vmatpush1.msra.mxu0 %v489
  %687 = vmatprep.subr.mxu0 %v498
  %688 = vmatpush1.msra.mxu0 %v497
  %689 = vmatprep.subr.mxu0 %v506
  %690 = vmatpush1.msra.mxu0 %v505
  %691 = vmatprep.subr.mxu0 %v514
  %692 = vmatpush1.msra.mxu0 %v513
  %693 = vmatprep.subr.mxu0 %v522
  %694 = vmatpush1.msra.mxu0 %v521
  %695 = vmatprep.subr.mxu0 %v530
  %696 = vmatpush1.msra.mxu0 %v529
  %697 = vmatprep.subr.mxu0 %v538
  %698 = vmatpush1.msra.mxu0 %v537
  %699 = vmatprep.subr.mxu0 %v546
  %700 = vmatpush1.msra.mxu0 %v545
  %701 = vmatprep.subr.mxu0 %v554
  %702 = vmatpush1.msra.mxu0 %v553
  %703 = vmatprep.subr.mxu0 %v562
  %704 = vmatpush1.msra.mxu0 %v561
  %705 = vmatprep.subr.mxu0 %v570
  %706 = vmatpush1.msra.mxu0 %v569
  %707 = vmatprep.subr.mxu0 %v578
  %708 = vmatpush1.msra.mxu0 %v577
  %709 = vmatprep.subr.mxu0 %v586
  %710 = vmatpush1.msra.mxu0 %v585
  %711 = vmatprep.subr.mxu0 %v594
  %712 = vmatpush1.msra.mxu0 %v593
  %713 = vmatprep.subr.mxu0 %v602
  %714 = vmatpush1.msra.mxu0 %v601
  %715 = vmatprep.mubr.f32.mxu0 %v350
  %716 = vmatmul.mubr.f32.gmra.mrb[0].mxu0 %v349
  %v717 = vpop.f32.mrb[0].mxu0
  %v718 = vadd.f32 %v614, %v717
  %v719 = vpop.f32.mrb[0].mxu0
  %v720 = vadd.f32 %v618, %v719
  %721 = vmatprep.mubr.f32.mxu0 %v352
  %722 = vmatmul.mubr.f32.gmra.mrb[0].mxu0 %v351
  %v723 = vpop.f32.mrb[0].mxu0
  %v724 = vadd.f32 %v614, %v723
  %v725 = vpop.f32.mrb[0].mxu0
  %v726 = vadd.f32 %v618, %v725
  %727 = vdwg.mxu0
  %728 = vmatprep.subr.mxu0 %v356
  %729 = vmatpush1.msra.mxu0 %v355
  %730 = vmatprep.subr.mxu0 %v364
  %731 = vmatpush1.msra.mxu0 %v363
  %732 = vmatprep.subr.mxu0 %v372
  %733 = vmatpush1.msra.mxu0 %v371
  %734 = vmatprep.subr.mxu0 %v380
  %735 = vmatpush1.msra.mxu0 %v379
  %736 = vmatprep.subr.mxu0 %v388
  %737 = vmatpush1.msra.mxu0 %v387
  %738 = vmatprep.subr.mxu0 %v396
  %739 = vmatpush1.msra.mxu0 %v395
  %740 = vmatprep.subr.mxu0 %v404
  %741 = vmatpush1.msra.mxu0 %v403
  %742 = vmatprep.subr.mxu0 %v412
  %743 = vmatpush1.msra.mxu0 %v411
  %744 = vmatprep.subr.mxu0 %v420
  %745 = vmatpush1.msra.mxu0 %v419
  %746 = vmatprep.subr.mxu0 %v428
  %747 = vmatpush1.msra.mxu0 %v427
  %748 = vmatprep.subr.mxu0 %v436
  %749 = vmatpush1.msra.mxu0 %v435
  %750 = vmatprep.subr.mxu0 %v444
  %751 = vmatpush1.msra.mxu0 %v443
  %752 = vmatprep.subr.mxu0 %v452
  %753 = vmatpush1.msra.mxu0 %v451
  %754 = vmatprep.subr.mxu0 %v460
  %755 = vmatpush1.msra.mxu0 %v459
  %756 = vmatprep.subr.mxu0 %v468
  %757 = vmatpush1.msra.mxu0 %v467
  %758 = vmatprep.subr.mxu0 %v476
  %759 = vmatpush1.msra.mxu0 %v475
  %760 = vmatprep.subr.mxu0 %v484
  %761 = vmatpush1.msra.mxu0 %v483
  %762 = vmatprep.subr.mxu0 %v492
  %763 = vmatpush1.msra.mxu0 %v491
  %764 = vmatprep.subr.mxu0 %v500
  %765 = vmatpush1.msra.mxu0 %v499
  %766 = vmatprep.subr.mxu0 %v508
  %767 = vmatpush1.msra.mxu0 %v507
  %768 = vmatprep.subr.mxu0 %v516
  %769 = vmatpush1.msra.mxu0 %v515
  %770 = vmatprep.subr.mxu0 %v524
  %771 = vmatpush1.msra.mxu0 %v523
  %772 = vmatprep.subr.mxu0 %v532
  %773 = vmatpush1.msra.mxu0 %v531
  %774 = vmatprep.subr.mxu0 %v540
  %775 = vmatpush1.msra.mxu0 %v539
  %776 = vmatprep.subr.mxu0 %v548
  %777 = vmatpush1.msra.mxu0 %v547
  %778 = vmatprep.subr.mxu0 %v556
  %779 = vmatpush1.msra.mxu0 %v555
  %780 = vmatprep.subr.mxu0 %v564
  %781 = vmatpush1.msra.mxu0 %v563
  %782 = vmatprep.subr.mxu0 %v572
  %783 = vmatpush1.msra.mxu0 %v571
  %784 = vmatprep.subr.mxu0 %v580
  %785 = vmatpush1.msra.mxu0 %v579
  %786 = vmatprep.subr.mxu0 %v588
  %787 = vmatpush1.msra.mxu0 %v587
  %788 = vmatprep.subr.mxu0 %v596
  %789 = vmatpush1.msra.mxu0 %v595
  %790 = vmatprep.subr.mxu0 %v604
  %791 = vmatpush1.msra.mxu0 %v603
  %792 = vmatprep.mubr.f32.mxu0 %v350
  %793 = vmatmul.mubr.f32.gmra.mrb[0].mxu0 %v349
  %v794 = vpop.f32.mrb[0].mxu0
  %v795 = vadd.f32 %v622, %v794
  %v796 = vpop.f32.mrb[0].mxu0
  %v797 = vadd.f32 %v626, %v796
  %798 = vmatprep.mubr.f32.mxu0 %v352
  %799 = vmatmul.mubr.f32.gmra.mrb[0].mxu0 %v351
  %v800 = vpop.f32.mrb[0].mxu0
  %v801 = vadd.f32 %v622, %v800
  %v802 = vpop.f32.mrb[0].mxu0
  %v803 = vadd.f32 %v626, %v802
  %804 = vdwg.mxu0
  %805 = vmatprep.subr.mxu0 %v358
  %806 = vmatpush1.msra.mxu0 %v357
  %807 = vmatprep.subr.mxu0 %v366
  %808 = vmatpush1.msra.mxu0 %v365
  %809 = vmatprep.subr.mxu0 %v374
  %810 = vmatpush1.msra.mxu0 %v373
  %811 = vmatprep.subr.mxu0 %v382
  %812 = vmatpush1.msra.mxu0 %v381
  %813 = vmatprep.subr.mxu0 %v390
  %814 = vmatpush1.msra.mxu0 %v389
  %815 = vmatprep.subr.mxu0 %v398
  %816 = vmatpush1.msra.mxu0 %v397
  %817 = vmatprep.subr.mxu0 %v406
  %818 = vmatpush1.msra.mxu0 %v405
  %819 = vmatprep.subr.mxu0 %v414
  %820 = vmatpush1.msra.mxu0 %v413
  %821 = vmatprep.subr.mxu0 %v422
  %822 = vmatpush1.msra.mxu0 %v421
  %823 = vmatprep.subr.mxu0 %v430
  %824 = vmatpush1.msra.mxu0 %v429
  %825 = vmatprep.subr.mxu0 %v438
  %826 = vmatpush1.msra.mxu0 %v437
  %827 = vmatprep.subr.mxu0 %v446
  %828 = vmatpush1.msra.mxu0 %v445
  %829 = vmatprep.subr.mxu0 %v454
  %830 = vmatpush1.msra.mxu0 %v453
  %831 = vmatprep.subr.mxu0 %v462
  %832 = vmatpush1.msra.mxu0 %v461
  %833 = vmatprep.subr.mxu0 %v470
  %834 = vmatpush1.msra.mxu0 %v469
  %835 = vmatprep.subr.mxu0 %v478
  %836 = vmatpush1.msra.mxu0 %v477
  %837 = vmatprep.subr.mxu0 %v486
  %838 = vmatpush1.msra.mxu0 %v485
  %839 = vmatprep.subr.mxu0 %v494
  %840 = vmatpush1.msra.mxu0 %v493
  %841 = vmatprep.subr.mxu0 %v502
  %842 = vmatpush1.msra.mxu0 %v501
  %843 = vmatprep.subr.mxu0 %v510
  %844 = vmatpush1.msra.mxu0 %v509
  %845 = vmatprep.subr.mxu0 %v518
  %846 = vmatpush1.msra.mxu0 %v517
  %847 = vmatprep.subr.mxu0 %v526
  %848 = vmatpush1.msra.mxu0 %v525
  %849 = vmatprep.subr.mxu0 %v534
  %850 = vmatpush1.msra.mxu0 %v533
  %851 = vmatprep.subr.mxu0 %v542
  %852 = vmatpush1.msra.mxu0 %v541
  %853 = vmatprep.subr.mxu0 %v550
  %854 = vmatpush1.msra.mxu0 %v549
  %855 = vmatprep.subr.mxu0 %v558
  %856 = vmatpush1.msra.mxu0 %v557
  %857 = vmatprep.subr.mxu0 %v566
  %858 = vmatpush1.msra.mxu0 %v565
  %859 = vmatprep.subr.mxu0 %v574
  %860 = vmatpush1.msra.mxu0 %v573
  %861 = vmatprep.subr.mxu0 %v582
  %862 = vmatpush1.msra.mxu0 %v581
  %863 = vmatprep.subr.mxu0 %v590
  %864 = vmatpush1.msra.mxu0 %v589
  %865 = vmatprep.subr.mxu0 %v598
  %866 = vmatpush1.msra.mxu0 %v597
  %867 = vmatprep.subr.mxu0 %v606
  %868 = vmatpush1.msra.mxu0 %v605
  %869 = vmatprep.mubr.f32.mxu0 %v350
  %870 = vmatmul.mubr.f32.gmra.mrb[0].mxu0 %v349
  %v871 = vpop.f32.mrb[0].mxu0
  %v872 = vadd.f32 %v630, %v871
  %v873 = vpop.f32.mrb[0].mxu0
  %v874 = vadd.f32 %v634, %v873
  %875 = vmatprep.mubr.f32.mxu0 %v352
  %876 = vmatmul.mubr.f32.gmra.mrb[0].mxu0 %v351
  %v877 = vpop.f32.mrb[0].mxu0
  %v878 = vadd.f32 %v630, %v877
  %v879 = vpop.f32.mrb[0].mxu0
  %v880 = vadd.f32 %v634, %v879
  %881 = vdwg.mxu0
  %882 = vmatprep.subr.mxu0 %v360
  %883 = vmatpush1.msra.mxu0 %v359
  %884 = vmatprep.subr.mxu0 %v368
  %885 = vmatpush1.msra.mxu0 %v367
  %886 = vmatprep.subr.mxu0 %v376
  %887 = vmatpush1.msra.mxu0 %v375
  %888 = vmatprep.subr.mxu0 %v384
  %889 = vmatpush1.msra.mxu0 %v383
  %890 = vmatprep.subr.mxu0 %v392
  %891 = vmatpush1.msra.mxu0 %v391
  %892 = vmatprep.subr.mxu0 %v400
  %893 = vmatpush1.msra.mxu0 %v399
  %894 = vmatprep.subr.mxu0 %v408
  %895 = vmatpush1.msra.mxu0 %v407
  %896 = vmatprep.subr.mxu0 %v416
  %897 = vmatpush1.msra.mxu0 %v415
  %898 = vmatprep.subr.mxu0 %v424
  %899 = vmatpush1.msra.mxu0 %v423
  %900 = vmatprep.subr.mxu0 %v432
  %901 = vmatpush1.msra.mxu0 %v431
  %902 = vmatprep.subr.mxu0 %v440
  %903 = vmatpush1.msra.mxu0 %v439
  %904 = vmatprep.subr.mxu0 %v448
  %905 = vmatpush1.msra.mxu0 %v447
  %906 = vmatprep.subr.mxu0 %v456
  %907 = vmatpush1.msra.mxu0 %v455
  %908 = vmatprep.subr.mxu0 %v464
  %909 = vmatpush1.msra.mxu0 %v463
  %910 = vmatprep.subr.mxu0 %v472
  %911 = vmatpush1.msra.mxu0 %v471
  %912 = vmatprep.subr.mxu0 %v480
  %913 = vmatpush1.msra.mxu0 %v479
  %914 = vmatprep.subr.mxu0 %v488
  %915 = vmatpush1.msra.mxu0 %v487
  %916 = vmatprep.subr.mxu0 %v496
  %917 = vmatpush1.msra.mxu0 %v495
  %918 = vmatprep.subr.mxu0 %v504
  %919 = vmatpush1.msra.mxu0 %v503
  %920 = vmatprep.subr.mxu0 %v512
  %921 = vmatpush1.msra.mxu0 %v511
  %922 = vmatprep.subr.mxu0 %v520
  %923 = vmatpush1.msra.mxu0 %v519
  %924 = vmatprep.subr.mxu0 %v528
  %925 = vmatpush1.msra.mxu0 %v527
  %926 = vmatprep.subr.mxu0 %v536
  %927 = vmatpush1.msra.mxu0 %v535
  %928 = vmatprep.subr.mxu0 %v544
  %929 = vmatpush1.msra.mxu0 %v543
  %930 = vmatprep.subr.mxu0 %v552
  %931 = vmatpush1.msra.mxu0 %v551
  %932 = vmatprep.subr.mxu0 %v560
  %933 = vmatpush1.msra.mxu0 %v559
  %934 = vmatprep.subr.mxu0 %v568
  %935 = vmatpush1.msra.mxu0 %v567
  %936 = vmatprep.subr.mxu0 %v576
  %937 = vmatpush1.msra.mxu0 %v575
  %938 = vmatprep.subr.mxu0 %v584
  %939 = vmatpush1.msra.mxu0 %v583
  %940 = vmatprep.subr.mxu0 %v592
  %941 = vmatpush1.msra.mxu0 %v591
  %942 = vmatprep.subr.mxu0 %v600
  %943 = vmatpush1.msra.mxu0 %v599
  %944 = vmatprep.subr.mxu0 %v608
  %945 = vmatpush1.msra.mxu0 %v607
  %946 = vmatprep.mubr.f32.mxu0 %v350
  %947 = vmatmul.mubr.f32.gmra.mrb[0].mxu0 %v349
  %v948 = vpop.f32.mrb[0].mxu0
  %v949 = vadd.f32 %v638, %v948
  %v950 = vpop.f32.mrb[0].mxu0
  %v951 = vadd.f32 %v642, %v950
  %952 = vmatprep.mubr.f32.mxu0 %v352
  %953 = vmatmul.mubr.f32.gmra.mrb[0].mxu0 %v351
  %v954 = vpop.f32.mrb[0].mxu0
  %v955 = vadd.f32 %v638, %v954
  %v956 = vpop.f32.mrb[0].mxu0
  %v957 = vadd.f32 %v642, %v956
  %958 = vdwg.mxu0
  %v959 = vld [vmem:[%s8] sm:$0xff]
  %v960 = vld [vmem:[%s7] sm:$0xff]
  %v961 = vld [vmem:[%s9] sm:$0xff]
  %v963 = vlaneseq
  %v964 = vshrl.u32 %v963, 7
  %v965 = vsub.s32 0, %v964
  %v966 = vrot.slane %v959, %v965
  %v967 = vlaneseq
  %v968 = vshrl.u32 %v967, 7
  %v969 = vsub.s32 1, %v968
  %v970 = vrot.slane %v959, %v969
  %v971 = vlaneseq
  %v972 = vshrl.u32 %v971, 7
  %v973 = vsub.s32 2, %v972
  %v974 = vrot.slane %v959, %v973
  %v975 = vlaneseq
  %v976 = vshrl.u32 %v975, 7
  %v977 = vsub.s32 3, %v976
  %v978 = vrot.slane %v959, %v977
  %v979 = vlaneseq
  %v980 = vshrl.u32 %v979, 7
  %v981 = vsub.s32 4, %v980
  %v982 = vrot.slane %v959, %v981
  %v983 = vlaneseq
  %v984 = vshrl.u32 %v983, 7
  %v985 = vsub.s32 5, %v984
  %v986 = vrot.slane %v959, %v985
  %v987 = vlaneseq
  %v988 = vshrl.u32 %v987, 7
  %v989 = vsub.s32 6, %v988
  %v990 = vrot.slane %v959, %v989
  %v991 = vlaneseq
  %v992 = vshrl.u32 %v991, 7
  %v993 = vsub.s32 7, %v992
  %v994 = vrot.slane %v959, %v993
  %v1003 = vsub.f32 %v966, %v718
  %v1004 = vsub.f32 %v970, %v720
  %v1005 = vsub.f32 %v974, %v795
  %v1006 = vsub.f32 %v978, %v797
  %v1007 = vsub.f32 %v982, %v872
  %v1008 = vsub.f32 %v986, %v874
  %v1009 = vsub.f32 %v990, %v949
  %v1010 = vsub.f32 %v994, %v951
  %v1011 = vsub.f32 %v966, %v724
  %v1012 = vsub.f32 %v970, %v726
  %v1013 = vsub.f32 %v974, %v801
  %v1014 = vsub.f32 %v978, %v803
  %v1015 = vsub.f32 %v982, %v878
  %v1016 = vsub.f32 %v986, %v880
  %v1017 = vsub.f32 %v990, %v955
  %v1018 = vsub.f32 %v994, %v957
  %v1019 = vmax.f32 %v1003, 0.0
  %v1020 = vmax.f32 %v1004, 0.0
  %v1021 = vmax.f32 %v1005, 0.0
  %v1022 = vmax.f32 %v1006, 0.0
  %v1023 = vmax.f32 %v1007, 0.0
  %v1024 = vmax.f32 %v1008, 0.0
  %v1025 = vmax.f32 %v1009, 0.0
  %v1026 = vmax.f32 %v1010, 0.0
  %v1027 = vmax.f32 %v1011, 0.0
  %v1028 = vmax.f32 %v1012, 0.0
  %v1029 = vmax.f32 %v1013, 0.0
  %v1030 = vmax.f32 %v1014, 0.0
  %v1031 = vmax.f32 %v1015, 0.0
  %v1032 = vmax.f32 %v1016, 0.0
  %v1033 = vmax.f32 %v1017, 0.0
  %v1034 = vmax.f32 %v1018, 0.0
  %v1035 = vand.u32 2147483647, %v1003
  %v1036 = vand.u32 2147483647, %v1004
  %v1037 = vand.u32 2147483647, %v1005
  %v1038 = vand.u32 2147483647, %v1006
  %v1039 = vand.u32 2147483647, %v1007
  %v1040 = vand.u32 2147483647, %v1008
  %v1041 = vand.u32 2147483647, %v1009
  %v1042 = vand.u32 2147483647, %v1010
  %v1043 = vand.u32 2147483647, %v1011
  %v1044 = vand.u32 2147483647, %v1012
  %v1045 = vand.u32 2147483647, %v1013
  %v1046 = vand.u32 2147483647, %v1014
  %v1047 = vand.u32 2147483647, %v1015
  %v1048 = vand.u32 2147483647, %v1016
  %v1049 = vand.u32 2147483647, %v1017
  %v1050 = vand.u32 2147483647, %v1018
  %v1051 = vsub.f32 0.0, %v1035
  %v1052 = vsub.f32 0.0, %v1036
  %v1053 = vsub.f32 0.0, %v1037
  %v1054 = vsub.f32 0.0, %v1038
  %v1055 = vsub.f32 0.0, %v1039
  %v1056 = vsub.f32 0.0, %v1040
  %v1057 = vsub.f32 0.0, %v1041
  %v1058 = vsub.f32 0.0, %v1042
  %v1059 = vsub.f32 0.0, %v1043
  %v1060 = vsub.f32 0.0, %v1044
  %v1061 = vsub.f32 0.0, %v1045
  %v1062 = vsub.f32 0.0, %v1046
  %v1063 = vsub.f32 0.0, %v1047
  %v1064 = vsub.f32 0.0, %v1048
  %v1065 = vsub.f32 0.0, %v1049
  %v1066 = vsub.f32 0.0, %v1050
  %v1067 = vmul.f32 %v1051, 1.442695
  %v1068 = vpow.pop %v1067
  %v1069 = vmul.f32 %v1052, 1.442695
  %v1070 = vpow.pop %v1069
  %v1071 = vmul.f32 %v1053, 1.442695
  %v1072 = vpow.pop %v1071
  %v1073 = vmul.f32 %v1054, 1.442695
  %v1074 = vpow.pop %v1073
  %v1075 = vmul.f32 %v1055, 1.442695
  %v1076 = vpow.pop %v1075
  %v1077 = vmul.f32 %v1056, 1.442695
  %v1078 = vpow.pop %v1077
  %v1079 = vmul.f32 %v1057, 1.442695
  %v1080 = vpow.pop %v1079
  %v1081 = vmul.f32 %v1058, 1.442695
  %v1082 = vpow.pop %v1081
  %v1083 = vmul.f32 %v1059, 1.442695
  %v1084 = vpow.pop %v1083
  %v1085 = vmul.f32 %v1060, 1.442695
  %v1086 = vpow.pop %v1085
  %v1087 = vmul.f32 %v1061, 1.442695
  %v1088 = vpow.pop %v1087
  %v1089 = vmul.f32 %v1062, 1.442695
  %v1090 = vpow.pop %v1089
  %v1091 = vmul.f32 %v1063, 1.442695
  %v1092 = vpow.pop %v1091
  %v1093 = vmul.f32 %v1064, 1.442695
  %v1094 = vpow.pop %v1093
  %v1095 = vmul.f32 %v1065, 1.442695
  %v1096 = vpow.pop %v1095
  %v1097 = vmul.f32 %v1066, 1.442695
  %v1098 = vpow.pop %v1097
  %v1099 = vadd.f32 %v1068, 1.0
  %v1100 = vlog2.pop %v1099
  %v1101 = vmul.f32 %v1100, 0.6931472
  %v1102 = vmul.f32 -0.5, %v1068
  %v1103 = vadd.f32 %v1102, 1.0
  %v1104 = vmul.f32 %v1103, %v1068
  %v1105 = vand.u32 2147483647, %v1068
  %vm1106 = vcmp.lt.f32.partialorder %v1105, 0.0004427343
  %v1107 = vsel %vm1106, %v1104, %v1101
  %v1108 = vadd.f32 %v1070, 1.0
  %v1109 = vlog2.pop %v1108
  %v1110 = vmul.f32 %v1109, 0.6931472
  %v1111 = vmul.f32 -0.5, %v1070
  %v1112 = vadd.f32 %v1111, 1.0
  %v1113 = vmul.f32 %v1112, %v1070
  %v1114 = vand.u32 2147483647, %v1070
  %vm1115 = vcmp.lt.f32.partialorder %v1114, 0.0004427343
  %v1116 = vsel %vm1115, %v1113, %v1110
  %v1117 = vadd.f32 %v1072, 1.0
  %v1118 = vlog2.pop %v1117
  %v1119 = vmul.f32 %v1118, 0.6931472
  %v1120 = vmul.f32 -0.5, %v1072
  %v1121 = vadd.f32 %v1120, 1.0
  %v1122 = vmul.f32 %v1121, %v1072
  %v1123 = vand.u32 2147483647, %v1072
  %vm1124 = vcmp.lt.f32.partialorder %v1123, 0.0004427343
  %v1125 = vsel %vm1124, %v1122, %v1119
  %v1126 = vadd.f32 %v1074, 1.0
  %v1127 = vlog2.pop %v1126
  %v1128 = vmul.f32 %v1127, 0.6931472
  %v1129 = vmul.f32 -0.5, %v1074
  %v1130 = vadd.f32 %v1129, 1.0
  %v1131 = vmul.f32 %v1130, %v1074
  %v1132 = vand.u32 2147483647, %v1074
  %vm1133 = vcmp.lt.f32.partialorder %v1132, 0.0004427343
  %v1134 = vsel %vm1133, %v1131, %v1128
  %v1135 = vadd.f32 %v1076, 1.0
  %v1136 = vlog2.pop %v1135
  %v1137 = vmul.f32 %v1136, 0.6931472
  %v1138 = vmul.f32 -0.5, %v1076
  %v1139 = vadd.f32 %v1138, 1.0
  %v1140 = vmul.f32 %v1139, %v1076
  %v1141 = vand.u32 2147483647, %v1076
  %vm1142 = vcmp.lt.f32.partialorder %v1141, 0.0004427343
  %v1143 = vsel %vm1142, %v1140, %v1137
  %v1144 = vadd.f32 %v1078, 1.0
  %v1145 = vlog2.pop %v1144
  %v1146 = vmul.f32 %v1145, 0.6931472
  %v1147 = vmul.f32 -0.5, %v1078
  %v1148 = vadd.f32 %v1147, 1.0
  %v1149 = vmul.f32 %v1148, %v1078
  %v1150 = vand.u32 2147483647, %v1078
  %vm1151 = vcmp.lt.f32.partialorder %v1150, 0.0004427343
  %v1152 = vsel %vm1151, %v1149, %v1146
  %v1153 = vadd.f32 %v1080, 1.0
  %v1154 = vlog2.pop %v1153
  %v1155 = vmul.f32 %v1154, 0.6931472
  %v1156 = vmul.f32 -0.5, %v1080
  %v1157 = vadd.f32 %v1156, 1.0
  %v1158 = vmul.f32 %v1157, %v1080
  %v1159 = vand.u32 2147483647, %v1080
  %vm1160 = vcmp.lt.f32.partialorder %v1159, 0.0004427343
  %v1161 = vsel %vm1160, %v1158, %v1155
  %v1162 = vadd.f32 %v1082, 1.0
  %v1163 = vlog2.pop %v1162
  %v1164 = vmul.f32 %v1163, 0.6931472
  %v1165 = vmul.f32 -0.5, %v1082
  %v1166 = vadd.f32 %v1165, 1.0
  %v1167 = vmul.f32 %v1166, %v1082
  %v1168 = vand.u32 2147483647, %v1082
  %vm1169 = vcmp.lt.f32.partialorder %v1168, 0.0004427343
  %v1170 = vsel %vm1169, %v1167, %v1164
  %v1171 = vadd.f32 %v1084, 1.0
  %v1172 = vlog2.pop %v1171
  %v1173 = vmul.f32 %v1172, 0.6931472
  %v1174 = vmul.f32 -0.5, %v1084
  %v1175 = vadd.f32 %v1174, 1.0
  %v1176 = vmul.f32 %v1175, %v1084
  %v1177 = vand.u32 2147483647, %v1084
  %vm1178 = vcmp.lt.f32.partialorder %v1177, 0.0004427343
  %v1179 = vsel %vm1178, %v1176, %v1173
  %v1180 = vadd.f32 %v1086, 1.0
  %v1181 = vlog2.pop %v1180
  %v1182 = vmul.f32 %v1181, 0.6931472
  %v1183 = vmul.f32 -0.5, %v1086
  %v1184 = vadd.f32 %v1183, 1.0
  %v1185 = vmul.f32 %v1184, %v1086
  %v1186 = vand.u32 2147483647, %v1086
  %vm1187 = vcmp.lt.f32.partialorder %v1186, 0.0004427343
  %v1188 = vsel %vm1187, %v1185, %v1182
  %v1189 = vadd.f32 %v1088, 1.0
  %v1190 = vlog2.pop %v1189
  %v1191 = vmul.f32 %v1190, 0.6931472
  %v1192 = vmul.f32 -0.5, %v1088
  %v1193 = vadd.f32 %v1192, 1.0
  %v1194 = vmul.f32 %v1193, %v1088
  %v1195 = vand.u32 2147483647, %v1088
  %vm1196 = vcmp.lt.f32.partialorder %v1195, 0.0004427343
  %v1197 = vsel %vm1196, %v1194, %v1191
  %v1198 = vadd.f32 %v1090, 1.0
  %v1199 = vlog2.pop %v1198
  %v1200 = vmul.f32 %v1199, 0.6931472
  %v1201 = vmul.f32 -0.5, %v1090
  %v1202 = vadd.f32 %v1201, 1.0
  %v1203 = vmul.f32 %v1202, %v1090
  %v1204 = vand.u32 2147483647, %v1090
  %vm1205 = vcmp.lt.f32.partialorder %v1204, 0.0004427343
  %v1206 = vsel %vm1205, %v1203, %v1200
  %v1207 = vadd.f32 %v1092, 1.0
  %v1208 = vlog2.pop %v1207
  %v1209 = vmul.f32 %v1208, 0.6931472
  %v1210 = vmul.f32 -0.5, %v1092
  %v1211 = vadd.f32 %v1210, 1.0
  %v1212 = vmul.f32 %v1211, %v1092
  %v1213 = vand.u32 2147483647, %v1092
  %vm1214 = vcmp.lt.f32.partialorder %v1213, 0.0004427343
  %v1215 = vsel %vm1214, %v1212, %v1209
  %v1216 = vadd.f32 %v1094, 1.0
  %v1217 = vlog2.pop %v1216
  %v1218 = vmul.f32 %v1217, 0.6931472
  %v1219 = vmul.f32 -0.5, %v1094
  %v1220 = vadd.f32 %v1219, 1.0
  %v1221 = vmul.f32 %v1220, %v1094
  %v1222 = vand.u32 2147483647, %v1094
  %vm1223 = vcmp.lt.f32.partialorder %v1222, 0.0004427343
  %v1224 = vsel %vm1223, %v1221, %v1218
  %v1225 = vadd.f32 %v1096, 1.0
  %v1226 = vlog2.pop %v1225
  %v1227 = vmul.f32 %v1226, 0.6931472
  %v1228 = vmul.f32 -0.5, %v1096
  %v1229 = vadd.f32 %v1228, 1.0
  %v1230 = vmul.f32 %v1229, %v1096
  %v1231 = vand.u32 2147483647, %v1096
  %vm1232 = vcmp.lt.f32.partialorder %v1231, 0.0004427343
  %v1233 = vsel %vm1232, %v1230, %v1227
  %v1234 = vadd.f32 %v1098, 1.0
  %v1235 = vlog2.pop %v1234
  %v1236 = vmul.f32 %v1235, 0.6931472
  %v1237 = vmul.f32 -0.5, %v1098
  %v1238 = vadd.f32 %v1237, 1.0
  %v1239 = vmul.f32 %v1238, %v1098
  %v1240 = vand.u32 2147483647, %v1098
  %vm1241 = vcmp.lt.f32.partialorder %v1240, 0.0004427343
  %v1242 = vsel %vm1241, %v1239, %v1236
  %v1243 = vadd.f32 %v1019, %v1107
  %v1244 = vadd.f32 %v1020, %v1116
  %v1245 = vadd.f32 %v1021, %v1125
  %v1246 = vadd.f32 %v1022, %v1134
  %v1247 = vadd.f32 %v1023, %v1143
  %v1248 = vadd.f32 %v1024, %v1152
  %v1249 = vadd.f32 %v1025, %v1161
  %v1250 = vadd.f32 %v1026, %v1170
  %v1251 = vadd.f32 %v1027, %v1179
  %v1252 = vadd.f32 %v1028, %v1188
  %v1253 = vadd.f32 %v1029, %v1197
  %v1254 = vadd.f32 %v1030, %v1206
  %v1255 = vadd.f32 %v1031, %v1215
  %v1256 = vadd.f32 %v1032, %v1224
  %v1257 = vadd.f32 %v1033, %v1233
  %v1258 = vadd.f32 %v1034, %v1242
  %v1259 = vsub.f32 %v966, %v1243
  %v1260 = vsub.f32 %v970, %v1244
  %v1261 = vsub.f32 %v974, %v1245
  %v1262 = vsub.f32 %v978, %v1246
  %v1263 = vsub.f32 %v982, %v1247
  %v1264 = vsub.f32 %v986, %v1248
  %v1265 = vsub.f32 %v990, %v1249
  %v1266 = vsub.f32 %v994, %v1250
  %v1267 = vsub.f32 %v966, %v1251
  %v1268 = vsub.f32 %v970, %v1252
  %v1269 = vsub.f32 %v974, %v1253
  %v1270 = vsub.f32 %v978, %v1254
  %v1271 = vsub.f32 %v982, %v1255
  %v1272 = vsub.f32 %v986, %v1256
  %v1273 = vsub.f32 %v990, %v1257
  %v1274 = vsub.f32 %v994, %v1258
  %v1276 = vlaneseq
  %v1277 = vshrl.u32 %v1276, 7
  %v1278 = vsub.s32 0, %v1277
  %v1279 = vrot.slane %v960, %v1278
  %v1280 = vlaneseq
  %v1281 = vshrl.u32 %v1280, 7
  %v1282 = vsub.s32 1, %v1281
  %v1283 = vrot.slane %v960, %v1282
  %v1284 = vlaneseq
  %v1285 = vshrl.u32 %v1284, 7
  %v1286 = vsub.s32 2, %v1285
  %v1287 = vrot.slane %v960, %v1286
  %v1288 = vlaneseq
  %v1289 = vshrl.u32 %v1288, 7
  %v1290 = vsub.s32 3, %v1289
  %v1291 = vrot.slane %v960, %v1290
  %v1292 = vlaneseq
  %v1293 = vshrl.u32 %v1292, 7
  %v1294 = vsub.s32 4, %v1293
  %v1295 = vrot.slane %v960, %v1294
  %v1296 = vlaneseq
  %v1297 = vshrl.u32 %v1296, 7
  %v1298 = vsub.s32 5, %v1297
  %v1299 = vrot.slane %v960, %v1298
  %v1300 = vlaneseq
  %v1301 = vshrl.u32 %v1300, 7
  %v1302 = vsub.s32 6, %v1301
  %v1303 = vrot.slane %v960, %v1302
  %v1304 = vlaneseq
  %v1305 = vshrl.u32 %v1304, 7
  %v1306 = vsub.s32 7, %v1305
  %v1307 = vrot.slane %v960, %v1306
  %v1316 = vsub.f32 %v1259, %v1279
  %v1317 = vsub.f32 %v1260, %v1283
  %v1318 = vsub.f32 %v1261, %v1287
  %v1319 = vsub.f32 %v1262, %v1291
  %v1320 = vsub.f32 %v1263, %v1295
  %v1321 = vsub.f32 %v1264, %v1299
  %v1322 = vsub.f32 %v1265, %v1303
  %v1323 = vsub.f32 %v1266, %v1307
  %v1324 = vsub.f32 %v1267, %v1279
  %v1325 = vsub.f32 %v1268, %v1283
  %v1326 = vsub.f32 %v1269, %v1287
  %v1327 = vsub.f32 %v1270, %v1291
  %v1328 = vsub.f32 %v1271, %v1295
  %v1329 = vsub.f32 %v1272, %v1299
  %v1330 = vsub.f32 %v1273, %v1303
  %v1331 = vsub.f32 %v1274, %v1307
  %v1332 = vmax.f32 %v1316, 0.0
  %v1333 = vmax.f32 %v1317, 0.0
  %v1334 = vmax.f32 %v1318, 0.0
  %v1335 = vmax.f32 %v1319, 0.0
  %v1336 = vmax.f32 %v1320, 0.0
  %v1337 = vmax.f32 %v1321, 0.0
  %v1338 = vmax.f32 %v1322, 0.0
  %v1339 = vmax.f32 %v1323, 0.0
  %v1340 = vmax.f32 %v1324, 0.0
  %v1341 = vmax.f32 %v1325, 0.0
  %v1342 = vmax.f32 %v1326, 0.0
  %v1343 = vmax.f32 %v1327, 0.0
  %v1344 = vmax.f32 %v1328, 0.0
  %v1345 = vmax.f32 %v1329, 0.0
  %v1346 = vmax.f32 %v1330, 0.0
  %v1347 = vmax.f32 %v1331, 0.0
  %v1348 = vand.u32 2147483647, %v1316
  %v1349 = vand.u32 2147483647, %v1317
  %v1350 = vand.u32 2147483647, %v1318
  %v1351 = vand.u32 2147483647, %v1319
  %v1352 = vand.u32 2147483647, %v1320
  %v1353 = vand.u32 2147483647, %v1321
  %v1354 = vand.u32 2147483647, %v1322
  %v1355 = vand.u32 2147483647, %v1323
  %v1356 = vand.u32 2147483647, %v1324
  %v1357 = vand.u32 2147483647, %v1325
  %v1358 = vand.u32 2147483647, %v1326
  %v1359 = vand.u32 2147483647, %v1327
  %v1360 = vand.u32 2147483647, %v1328
  %v1361 = vand.u32 2147483647, %v1329
  %v1362 = vand.u32 2147483647, %v1330
  %v1363 = vand.u32 2147483647, %v1331
  %v1364 = vsub.f32 0.0, %v1348
  %v1365 = vsub.f32 0.0, %v1349
  %v1366 = vsub.f32 0.0, %v1350
  %v1367 = vsub.f32 0.0, %v1351
  %v1368 = vsub.f32 0.0, %v1352
  %v1369 = vsub.f32 0.0, %v1353
  %v1370 = vsub.f32 0.0, %v1354
  %v1371 = vsub.f32 0.0, %v1355
  %v1372 = vsub.f32 0.0, %v1356
  %v1373 = vsub.f32 0.0, %v1357
  %v1374 = vsub.f32 0.0, %v1358
  %v1375 = vsub.f32 0.0, %v1359
  %v1376 = vsub.f32 0.0, %v1360
  %v1377 = vsub.f32 0.0, %v1361
  %v1378 = vsub.f32 0.0, %v1362
  %v1379 = vsub.f32 0.0, %v1363
  %v1380 = vmul.f32 %v1364, 1.442695
  %v1381 = vpow.pop %v1380
  %v1382 = vmul.f32 %v1365, 1.442695
  %v1383 = vpow.pop %v1382
  %v1384 = vmul.f32 %v1366, 1.442695
  %v1385 = vpow.pop %v1384
  %v1386 = vmul.f32 %v1367, 1.442695
  %v1387 = vpow.pop %v1386
  %v1388 = vmul.f32 %v1368, 1.442695
  %v1389 = vpow.pop %v1388
  %v1390 = vmul.f32 %v1369, 1.442695
  %v1391 = vpow.pop %v1390
  %v1392 = vmul.f32 %v1370, 1.442695
  %v1393 = vpow.pop %v1392
  %v1394 = vmul.f32 %v1371, 1.442695
  %v1395 = vpow.pop %v1394
  %v1396 = vmul.f32 %v1372, 1.442695
  %v1397 = vpow.pop %v1396
  %v1398 = vmul.f32 %v1373, 1.442695
  %v1399 = vpow.pop %v1398
  %v1400 = vmul.f32 %v1374, 1.442695
  %v1401 = vpow.pop %v1400
  %v1402 = vmul.f32 %v1375, 1.442695
  %v1403 = vpow.pop %v1402
  %v1404 = vmul.f32 %v1376, 1.442695
  %v1405 = vpow.pop %v1404
  %v1406 = vmul.f32 %v1377, 1.442695
  %v1407 = vpow.pop %v1406
  %v1408 = vmul.f32 %v1378, 1.442695
  %v1409 = vpow.pop %v1408
  %v1410 = vmul.f32 %v1379, 1.442695
  %v1411 = vpow.pop %v1410
  %v1412 = vadd.f32 %v1381, 1.0
  %v1413 = vlog2.pop %v1412
  %v1414 = vmul.f32 %v1413, 0.6931472
  %v1415 = vmul.f32 -0.5, %v1381
  %v1416 = vadd.f32 %v1415, 1.0
  %v1417 = vmul.f32 %v1416, %v1381
  %v1418 = vand.u32 2147483647, %v1381
  %vm1419 = vcmp.lt.f32.partialorder %v1418, 0.0004427343
  %v1420 = vsel %vm1419, %v1417, %v1414
  %v1421 = vadd.f32 %v1383, 1.0
  %v1422 = vlog2.pop %v1421
  %v1423 = vmul.f32 %v1422, 0.6931472
  %v1424 = vmul.f32 -0.5, %v1383
  %v1425 = vadd.f32 %v1424, 1.0
  %v1426 = vmul.f32 %v1425, %v1383
  %v1427 = vand.u32 2147483647, %v1383
  %vm1428 = vcmp.lt.f32.partialorder %v1427, 0.0004427343
  %v1429 = vsel %vm1428, %v1426, %v1423
  %v1430 = vadd.f32 %v1385, 1.0
  %v1431 = vlog2.pop %v1430
  %v1432 = vmul.f32 %v1431, 0.6931472
  %v1433 = vmul.f32 -0.5, %v1385
  %v1434 = vadd.f32 %v1433, 1.0
  %v1435 = vmul.f32 %v1434, %v1385
  %v1436 = vand.u32 2147483647, %v1385
  %vm1437 = vcmp.lt.f32.partialorder %v1436, 0.0004427343
  %v1438 = vsel %vm1437, %v1435, %v1432
  %v1439 = vadd.f32 %v1387, 1.0
  %v1440 = vlog2.pop %v1439
  %v1441 = vmul.f32 %v1440, 0.6931472
  %v1442 = vmul.f32 -0.5, %v1387
  %v1443 = vadd.f32 %v1442, 1.0
  %v1444 = vmul.f32 %v1443, %v1387
  %v1445 = vand.u32 2147483647, %v1387
  %vm1446 = vcmp.lt.f32.partialorder %v1445, 0.0004427343
  %v1447 = vsel %vm1446, %v1444, %v1441
  %v1448 = vadd.f32 %v1389, 1.0
  %v1449 = vlog2.pop %v1448
  %v1450 = vmul.f32 %v1449, 0.6931472
  %v1451 = vmul.f32 -0.5, %v1389
  %v1452 = vadd.f32 %v1451, 1.0
  %v1453 = vmul.f32 %v1452, %v1389
  %v1454 = vand.u32 2147483647, %v1389
  %vm1455 = vcmp.lt.f32.partialorder %v1454, 0.0004427343
  %v1456 = vsel %vm1455, %v1453, %v1450
  %v1457 = vadd.f32 %v1391, 1.0
  %v1458 = vlog2.pop %v1457
  %v1459 = vmul.f32 %v1458, 0.6931472
  %v1460 = vmul.f32 -0.5, %v1391
  %v1461 = vadd.f32 %v1460, 1.0
  %v1462 = vmul.f32 %v1461, %v1391
  %v1463 = vand.u32 2147483647, %v1391
  %vm1464 = vcmp.lt.f32.partialorder %v1463, 0.0004427343
  %v1465 = vsel %vm1464, %v1462, %v1459
  %v1466 = vadd.f32 %v1393, 1.0
  %v1467 = vlog2.pop %v1466
  %v1468 = vmul.f32 %v1467, 0.6931472
  %v1469 = vmul.f32 -0.5, %v1393
  %v1470 = vadd.f32 %v1469, 1.0
  %v1471 = vmul.f32 %v1470, %v1393
  %v1472 = vand.u32 2147483647, %v1393
  %vm1473 = vcmp.lt.f32.partialorder %v1472, 0.0004427343
  %v1474 = vsel %vm1473, %v1471, %v1468
  %v1475 = vadd.f32 %v1395, 1.0
  %v1476 = vlog2.pop %v1475
  %v1477 = vmul.f32 %v1476, 0.6931472
  %v1478 = vmul.f32 -0.5, %v1395
  %v1479 = vadd.f32 %v1478, 1.0
  %v1480 = vmul.f32 %v1479, %v1395
  %v1481 = vand.u32 2147483647, %v1395
  %vm1482 = vcmp.lt.f32.partialorder %v1481, 0.0004427343
  %v1483 = vsel %vm1482, %v1480, %v1477
  %v1484 = vadd.f32 %v1397, 1.0
  %v1485 = vlog2.pop %v1484
  %v1486 = vmul.f32 %v1485, 0.6931472
  %v1487 = vmul.f32 -0.5, %v1397
  %v1488 = vadd.f32 %v1487, 1.0
  %v1489 = vmul.f32 %v1488, %v1397
  %v1490 = vand.u32 2147483647, %v1397
  %vm1491 = vcmp.lt.f32.partialorder %v1490, 0.0004427343
  %v1492 = vsel %vm1491, %v1489, %v1486
  %v1493 = vadd.f32 %v1399, 1.0
  %v1494 = vlog2.pop %v1493
  %v1495 = vmul.f32 %v1494, 0.6931472
  %v1496 = vmul.f32 -0.5, %v1399
  %v1497 = vadd.f32 %v1496, 1.0
  %v1498 = vmul.f32 %v1497, %v1399
  %v1499 = vand.u32 2147483647, %v1399
  %vm1500 = vcmp.lt.f32.partialorder %v1499, 0.0004427343
  %v1501 = vsel %vm1500, %v1498, %v1495
  %v1502 = vadd.f32 %v1401, 1.0
  %v1503 = vlog2.pop %v1502
  %v1504 = vmul.f32 %v1503, 0.6931472
  %v1505 = vmul.f32 -0.5, %v1401
  %v1506 = vadd.f32 %v1505, 1.0
  %v1507 = vmul.f32 %v1506, %v1401
  %v1508 = vand.u32 2147483647, %v1401
  %vm1509 = vcmp.lt.f32.partialorder %v1508, 0.0004427343
  %v1510 = vsel %vm1509, %v1507, %v1504
  %v1511 = vadd.f32 %v1403, 1.0
  %v1512 = vlog2.pop %v1511
  %v1513 = vmul.f32 %v1512, 0.6931472
  %v1514 = vmul.f32 -0.5, %v1403
  %v1515 = vadd.f32 %v1514, 1.0
  %v1516 = vmul.f32 %v1515, %v1403
  %v1517 = vand.u32 2147483647, %v1403
  %vm1518 = vcmp.lt.f32.partialorder %v1517, 0.0004427343
  %v1519 = vsel %vm1518, %v1516, %v1513
  %v1520 = vadd.f32 %v1405, 1.0
  %v1521 = vlog2.pop %v1520
  %v1522 = vmul.f32 %v1521, 0.6931472
  %v1523 = vmul.f32 -0.5, %v1405
  %v1524 = vadd.f32 %v1523, 1.0
  %v1525 = vmul.f32 %v1524, %v1405
  %v1526 = vand.u32 2147483647, %v1405
  %vm1527 = vcmp.lt.f32.partialorder %v1526, 0.0004427343
  %v1528 = vsel %vm1527, %v1525, %v1522
  %v1529 = vadd.f32 %v1407, 1.0
  %v1530 = vlog2.pop %v1529
  %v1531 = vmul.f32 %v1530, 0.6931472
  %v1532 = vmul.f32 -0.5, %v1407
  %v1533 = vadd.f32 %v1532, 1.0
  %v1534 = vmul.f32 %v1533, %v1407
  %v1535 = vand.u32 2147483647, %v1407
  %vm1536 = vcmp.lt.f32.partialorder %v1535, 0.0004427343
  %v1537 = vsel %vm1536, %v1534, %v1531
  %v1538 = vadd.f32 %v1409, 1.0
  %v1539 = vlog2.pop %v1538
  %v1540 = vmul.f32 %v1539, 0.6931472
  %v1541 = vmul.f32 -0.5, %v1409
  %v1542 = vadd.f32 %v1541, 1.0
  %v1543 = vmul.f32 %v1542, %v1409
  %v1544 = vand.u32 2147483647, %v1409
  %vm1545 = vcmp.lt.f32.partialorder %v1544, 0.0004427343
  %v1546 = vsel %vm1545, %v1543, %v1540
  %v1547 = vadd.f32 %v1411, 1.0
  %v1548 = vlog2.pop %v1547
  %v1549 = vmul.f32 %v1548, 0.6931472
  %v1550 = vmul.f32 -0.5, %v1411
  %v1551 = vadd.f32 %v1550, 1.0
  %v1552 = vmul.f32 %v1551, %v1411
  %v1553 = vand.u32 2147483647, %v1411
  %vm1554 = vcmp.lt.f32.partialorder %v1553, 0.0004427343
  %v1555 = vsel %vm1554, %v1552, %v1549
  %v1556 = vadd.f32 %v1332, %v1420
  %v1557 = vadd.f32 %v1333, %v1429
  %v1558 = vadd.f32 %v1334, %v1438
  %v1559 = vadd.f32 %v1335, %v1447
  %v1560 = vadd.f32 %v1336, %v1456
  %v1561 = vadd.f32 %v1337, %v1465
  %v1562 = vadd.f32 %v1338, %v1474
  %v1563 = vadd.f32 %v1339, %v1483
  %v1564 = vadd.f32 %v1340, %v1492
  %v1565 = vadd.f32 %v1341, %v1501
  %v1566 = vadd.f32 %v1342, %v1510
  %v1567 = vadd.f32 %v1343, %v1519
  %v1568 = vadd.f32 %v1344, %v1528
  %v1569 = vadd.f32 %v1345, %v1537
  %v1570 = vadd.f32 %v1346, %v1546
  %v1571 = vadd.f32 %v1347, %v1555
  %v1572 = vadd.f32 %v1279, %v1556
  %v1573 = vadd.f32 %v1283, %v1557
  %v1574 = vadd.f32 %v1287, %v1558
  %v1575 = vadd.f32 %v1291, %v1559
  %v1576 = vadd.f32 %v1295, %v1560
  %v1577 = vadd.f32 %v1299, %v1561
  %v1578 = vadd.f32 %v1303, %v1562
  %v1579 = vadd.f32 %v1307, %v1563
  %v1580 = vadd.f32 %v1279, %v1564
  %v1581 = vadd.f32 %v1283, %v1565
  %v1582 = vadd.f32 %v1287, %v1566
  %v1583 = vadd.f32 %v1291, %v1567
  %v1584 = vadd.f32 %v1295, %v1568
  %v1585 = vadd.f32 %v1299, %v1569
  %v1586 = vadd.f32 %v1303, %v1570
  %v1587 = vadd.f32 %v1307, %v1571
  %v1589 = vlaneseq
  %v1590 = vshrl.u32 %v1589, 7
  %v1591 = vsub.s32 0, %v1590
  %v1592 = vrot.slane %v961, %v1591
  %v1593 = vlaneseq
  %v1594 = vshrl.u32 %v1593, 7
  %v1595 = vsub.s32 1, %v1594
  %v1596 = vrot.slane %v961, %v1595
  %v1597 = vlaneseq
  %v1598 = vshrl.u32 %v1597, 7
  %v1599 = vsub.s32 2, %v1598
  %v1600 = vrot.slane %v961, %v1599
  %v1601 = vlaneseq
  %v1602 = vshrl.u32 %v1601, 7
  %v1603 = vsub.s32 3, %v1602
  %v1604 = vrot.slane %v961, %v1603
  %v1605 = vlaneseq
  %v1606 = vshrl.u32 %v1605, 7
  %v1607 = vsub.s32 4, %v1606
  %v1608 = vrot.slane %v961, %v1607
  %v1609 = vlaneseq
  %v1610 = vshrl.u32 %v1609, 7
  %v1611 = vsub.s32 5, %v1610
  %v1612 = vrot.slane %v961, %v1611
  %v1613 = vlaneseq
  %v1614 = vshrl.u32 %v1613, 7
  %v1615 = vsub.s32 6, %v1614
  %v1616 = vrot.slane %v961, %v1615
  %v1617 = vlaneseq
  %v1618 = vshrl.u32 %v1617, 7
  %v1619 = vsub.s32 7, %v1618
  %v1620 = vrot.slane %v961, %v1619
  %v1629 = vmul.f32 %v1592, %v1572
  %v1630 = vmul.f32 %v1596, %v1573
  %v1631 = vmul.f32 %v1600, %v1574
  %v1632 = vmul.f32 %v1604, %v1575
  %v1633 = vmul.f32 %v1608, %v1576
  %v1634 = vmul.f32 %v1612, %v1577
  %v1635 = vmul.f32 %v1616, %v1578
  %v1636 = vmul.f32 %v1620, %v1579
  %v1637 = vmul.f32 %v1592, %v1580
  %v1638 = vmul.f32 %v1596, %v1581
  %v1639 = vmul.f32 %v1600, %v1582
  %v1640 = vmul.f32 %v1604, %v1583
  %v1641 = vmul.f32 %v1608, %v1584
  %v1642 = vmul.f32 %v1612, %v1585
  %v1643 = vmul.f32 %v1616, %v1586
  %v1644 = vmul.f32 %v1620, %v1587
  %v1645 = vsub.f32 1.0, %v961
  %v1647 = vlaneseq
  %v1648 = vshrl.u32 %v1647, 7
  %v1649 = vsub.s32 0, %v1648
  %v1650 = vrot.slane %v1645, %v1649
  %v1651 = vlaneseq
  %v1652 = vshrl.u32 %v1651, 7
  %v1653 = vsub.s32 1, %v1652
  %v1654 = vrot.slane %v1645, %v1653
  %v1655 = vlaneseq
  %v1656 = vshrl.u32 %v1655, 7
  %v1657 = vsub.s32 2, %v1656
  %v1658 = vrot.slane %v1645, %v1657
  %v1659 = vlaneseq
  %v1660 = vshrl.u32 %v1659, 7
  %v1661 = vsub.s32 3, %v1660
  %v1662 = vrot.slane %v1645, %v1661
  %v1663 = vlaneseq
  %v1664 = vshrl.u32 %v1663, 7
  %v1665 = vsub.s32 4, %v1664
  %v1666 = vrot.slane %v1645, %v1665
  %v1667 = vlaneseq
  %v1668 = vshrl.u32 %v1667, 7
  %v1669 = vsub.s32 5, %v1668
  %v1670 = vrot.slane %v1645, %v1669
  %v1671 = vlaneseq
  %v1672 = vshrl.u32 %v1671, 7
  %v1673 = vsub.s32 6, %v1672
  %v1674 = vrot.slane %v1645, %v1673
  %v1675 = vlaneseq
  %v1676 = vshrl.u32 %v1675, 7
  %v1677 = vsub.s32 7, %v1676
  %v1678 = vrot.slane %v1645, %v1677
  %v1687 = vmul.f32 %v1650, %v718
  %v1688 = vmul.f32 %v1654, %v720
  %v1689 = vmul.f32 %v1658, %v795
  %v1690 = vmul.f32 %v1662, %v797
  %v1691 = vmul.f32 %v1666, %v872
  %v1692 = vmul.f32 %v1670, %v874
  %v1693 = vmul.f32 %v1674, %v949
  %v1694 = vmul.f32 %v1678, %v951
  %v1695 = vmul.f32 %v1650, %v724
  %v1696 = vmul.f32 %v1654, %v726
  %v1697 = vmul.f32 %v1658, %v801
  %v1698 = vmul.f32 %v1662, %v803
  %v1699 = vmul.f32 %v1666, %v878
  %v1700 = vmul.f32 %v1670, %v880
  %v1701 = vmul.f32 %v1674, %v955
  %v1702 = vmul.f32 %v1678, %v957
  %v1703 = vadd.f32 %v1629, %v1687
  %v1704 = vadd.f32 %v1630, %v1688
  %v1705 = vadd.f32 %v1631, %v1689
  %v1706 = vadd.f32 %v1632, %v1690
  %v1707 = vadd.f32 %v1633, %v1691
  %v1708 = vadd.f32 %v1634, %v1692
  %v1709 = vadd.f32 %v1635, %v1693
  %v1710 = vadd.f32 %v1636, %v1694
  %v1711 = vadd.f32 %v1637, %v1695
  %v1712 = vadd.f32 %v1638, %v1696
  %v1713 = vadd.f32 %v1639, %v1697
  %v1714 = vadd.f32 %v1640, %v1698
  %v1715 = vadd.f32 %v1641, %v1699
  %v1716 = vadd.f32 %v1642, %v1700
  %v1717 = vadd.f32 %v1643, %v1701
  %v1718 = vadd.f32 %v1644, %v1702
  %1719 = vst [vmem:[%s10] sm:$0xff] %v1703
  %1720 = vst [vmem:[%s10 + $0x8] sm:$0xff] %v1704
  %1721 = vst [vmem:[%s10 + $0x10] sm:$0xff] %v1705
  %1722 = vst [vmem:[%s10 + $0x18] sm:$0xff] %v1706
  %1723 = vst [vmem:[%s10 + $0x20] sm:$0xff] %v1707
  %1724 = vst [vmem:[%s10 + $0x28] sm:$0xff] %v1708
  %1725 = vst [vmem:[%s10 + $0x30] sm:$0xff] %v1709
  %1726 = vst [vmem:[%s10 + $0x38] sm:$0xff] %v1710
  %1727 = vst [vmem:[%s10 + $0x40] sm:$0xff] %v1711
  %1728 = vst [vmem:[%s10 + $0x48] sm:$0xff] %v1712
  %1729 = vst [vmem:[%s10 + $0x50] sm:$0xff] %v1713
  %1730 = vst [vmem:[%s10 + $0x58] sm:$0xff] %v1714
  %1731 = vst [vmem:[%s10 + $0x60] sm:$0xff] %v1715
  %1732 = vst [vmem:[%s10 + $0x68] sm:$0xff] %v1716
  %1733 = vst [vmem:[%s10 + $0x70] sm:$0xff] %v1717
  %1734 = vst [vmem:[%s10 + $0x78] sm:$0xff] %v1718
  // Predicated region
  $region42: #{_forward_impl.1} parent=0 // pred_check
    _
  $region43: #{_forward_impl.1} parent=0 // pred_check_branch
    %1736 = sbr.rel (0) target = $region45
  $region44: #{_forward_impl.1} parent=0 // pred_region
    _
  $region45: #{_forward_impl.1} parent=0 // pred_fallthru
    _
  // Predicated region
  $region46: #{_forward_impl.1} parent=0 // pred_check
    _
  $region47: #{_forward_impl.1} parent=0 // pred_check_branch
    %1738 = sbr.rel (0) target = $region49
  $region48: #{_forward_impl.1} parent=0 // pred_region
    _
  $region49: #{_forward_impl.1} parent=0 // pred_fallthru
    _

</llo_original>
